<compile_context>
chip_gen: v7x
topology: tpu7x:2x2x1
jax: 0.10.0
libtpu: 0.0.40
codegen_flags: <defaults>
</compile_context>

<pallas_src>
import jax
import jax.numpy as jnp
from jax import lax
from jax.experimental import pallas as pl
from jax.experimental.pallas import tpu as pltpu

# ---- static shape configuration -------------------------------------------
B = 2
C_IN = 128
L_IN = 119                    # chosen so the flattened conv features are exactly 128
L_PAD = 128                   # per-sample length padded to one full lane tile
K = 8
C0 = 32
C1 = 64
L0 = L_IN - K + 1             # 112 : conv0 output length
L0P = (L0 - 8) // 8 + 1       # 14  : AvgPool1d(8, stride=8) output length
L1 = L0P - K + 1              # 7   : conv1 output length
PW, PS = 4, 2                 # AvgPool2d(4, stride=2) interpreted along length
L1P = (L1 - PW) // PS + 1     # 2
N_CLASSES = 10
EPS = 1e-5

ACC0_W = (B - 1) * L_PAD + L0     # 240: last valid conv0 output column + 1
ACC1_W = (B - 1) * L0P + L1       # 21 : last valid conv1 output column + 1

assert C1 * L1P == 128            # fc0 expects 128 input features
assert L0 == L0P * 8              # AvgPool1d(8,8) is exact (no truncation)
assert ACC0_W + (K - 1) <= B * L_PAD
assert ACC1_W + (K - 1) <= B * L0P


# ---- the Pallas kernel ------------------------------------------------------
def cnn_kernel(x_ref, w0_ref, s0_ref, t0_ref, w1_ref, s1_ref, t1_ref,
               p0_ref, p1_ref, wf0_ref, wf1_ref, bfc_ref, out_ref):
    # Both samples lane-concatenated: (C_IN, B*L_PAD).  Each sample occupies a
    # full 128-lane tile, so the placement is vreg-aligned (no relayout).
    x_all = jnp.concatenate([x_ref[b] for b in range(B)], axis=1)

    # ---- conv0: ONE MXU matmul with the 8 taps stacked along output rows ----
    # y0[k*C0 + c, l] = sum_cin W0[c, cin, k] * x[cin, l]
    y0 = jnp.dot(w0_ref[...], x_all,
                 preferred_element_type=jnp.float32)          # (K*C0, B*L_PAD)

    # Tap combine: block k lives at sublane-aligned rows [k*C0, (k+1)*C0) and is
    # shifted left by k lanes; only the first ACC0_W output columns are kept.
    acc0 = y0[0:C0, 0:ACC0_W]
    for k in range(1, K):
        acc0 = acc0 + y0[k * C0:(k + 1) * C0, k:k + ACC0_W]

    # BatchNorm1d(32) (eval, folded into scale/shift) + ReLU; per-channel
    # parameters broadcast along lanes.
    h0 = jnp.maximum(acc0 * s0_ref[...] + t0_ref[...], 0.0)   # (C0, ACC0_W)

    # AvgPool1d(8, stride=8) as a matmul; the 1/8 divisor is folded into the
    # host-built block-diagonal pooling matrix, which also masks the invalid
    # (padding / cross-sample) columns.
    h0p = jnp.dot(h0, p0_ref[...],
                  preferred_element_type=jnp.float32)         # (C0, B*L0P)

    # ---- conv1: same stacked-tap single matmul (contraction over 32 ch) -----
    y1 = jnp.dot(w1_ref[...], h0p,
                 preferred_element_type=jnp.float32)          # (K*C1, B*L0P)
    acc1 = y1[0:C1, 0:ACC1_W]
    for k in range(1, K):
        acc1 = acc1 + y1[k * C1:(k + 1) * C1, k:k + ACC1_W]

    # BatchNorm1d(64) (eval, folded) + ReLU
    h1 = jnp.maximum(acc1 * s1_ref[...] + t1_ref[...], 0.0)   # (C1, ACC1_W)

    # AvgPool(kernel=4, stride=2) along length as a matmul (1/4 folded in);
    # output columns ordered (pool_window, sample).
    pooled = jnp.dot(h1, p1_ref[...],
                     preferred_element_type=jnp.float32)      # (C1, L1P*B)

    # fc0: one (10,64)@(64,B) dot per pool window against the per-window split
    # of the PyTorch fc weight, plus bias -> logits^T (classes on sublanes).
    logits_t = (jnp.dot(wf0_ref[...], pooled[:, 0:B],
                        preferred_element_type=jnp.float32)
                + jnp.dot(wf1_ref[...], pooled[:, B:2 * B],
                          preferred_element_type=jnp.float32)
                + bfc_ref[...])                               # (10, B)

    # log_softmax over classes (sublane axis)
    m = jnp.max(logits_t, axis=0, keepdims=True)
    z = logits_t - m
    lse = jnp.log(jnp.sum(jnp.exp(z), axis=0, keepdims=True))
    out_ref[...] = (z - lse).astype(out_ref.dtype)


# ---- wrapper (single jit: pad + kernel + tiny output transpose) -------------
@jax.jit
def forward(x_ncl, packed):
    """x_ncl: (B, 128, L_IN) float32 in PyTorch NCL convention."""
    (w0s, s0, t0, w1s, s1, t1, p0, p1, wf0, wf1, bfc_col) = packed

    # Pad each sample's length to a full 128-lane tile so the in-kernel
    # per-sample lane offsets are vreg-aligned (no transpose, just a pad).
    x_pad = jnp.pad(x_ncl.astype(jnp.float32),
                    ((0, 0), (0, 0), (0, L_PAD - L_IN)))

    vmem = pl.BlockSpec(memory_space=pltpu.MemorySpace.VMEM)
    # Grid-less single invocation (few-microsecond kernel, everything <1 MiB of
    # VMEM).  On v7x with a real batch, reintroduce grid=(B,) with
    # dimension_semantics=("parallel",) to feed both TensorCores.
    out_t = pl.pallas_call(
        cnn_kernel,
        out_shape=jax.ShapeDtypeStruct((N_CLASSES, B), jnp.float32),
        in_specs=[vmem] * 12,
        out_specs=vmem,
    )(x_pad, w0s, s0, t0, w1s, s1, t1, p0, p1, wf0, wf1, bfc_col)

    # (10, B) -> (B, 10): 80-byte transpose fused under the same jit.
    return out_t.T


# ---- deterministic parameter construction -----------------------------------
def init_params(key):
    ks = jax.random.split(key, 14)
    # conv0: PyTorch weight (C0, C_IN, K), bias (C0,)
    w0_pt = jax.random.normal(ks[0], (C0, C_IN, K), jnp.float32) * 0.05
    b0 = jax.random.normal(ks[1], (C0,), jnp.float32) * 0.05
    g0 = 1.0 + 0.1 * jax.random.normal(ks[2], (C0,), jnp.float32)
    be0 = 0.1 * jax.random.normal(ks[3], (C0,), jnp.float32)
    rm0 = 0.1 * jax.random.normal(ks[4], (C0,), jnp.float32)
    rv0 = 1.0 + 0.1 * jnp.abs(jax.random.normal(ks[5], (C0,), jnp.float32))
    # conv1: PyTorch weight (C1, C0, K), bias (C1,)
    w1_pt = jax.random.normal(ks[6], (C1, C0, K), jnp.float32) * 0.05
    b1 = jax.random.normal(ks[7], (C1,), jnp.float32) * 0.05
    g1 = 1.0 + 0.1 * jax.random.normal(ks[8], (C1,), jnp.float32)
    be1 = 0.1 * jax.random.normal(ks[9], (C1,), jnp.float32)
    rm1 = 0.1 * jax.random.normal(ks[10], (C1,), jnp.float32)
    rv1 = 1.0 + 0.1 * jnp.abs(jax.random.normal(ks[11], (C1,), jnp.float32))
    # fc0: PyTorch weight (10, 128), bias (10,)
    wfc = jax.random.normal(ks[12], (N_CLASSES, C1 * L1P), jnp.float32) * 0.05
    bfc = jax.random.normal(ks[13], (N_CLASSES,), jnp.float32) * 0.05

    raw = (w0_pt, b0, g0, be0, rm0, rv0,
           w1_pt, b1, g1, be1, rm1, rv1, wfc, bfc)

    # ---- host-side packing for the kernel -----------------------------------
    # TODO(synk): training-mode BatchNorm (batch statistics) and dropout are not
    # implemented; eval-mode running stats are folded into scale/shift.
    # conv0 taps stacked along output rows: W0s[k*C0 + c, cin] = w0_pt[c, cin, k]
    w0s = jnp.transpose(w0_pt, (2, 0, 1)).reshape(K * C0, C_IN)
    s0v = g0 / jnp.sqrt(rv0 + EPS)
    s0 = s0v.reshape(C0, 1)
    t0 = ((b0 - rm0) * s0v + be0).reshape(C0, 1)
    # conv1 taps stacked: W1s[k*C1 + c1, c0] = w1_pt[c1, c0, k]
    w1s = jnp.transpose(w1_pt, (2, 0, 1)).reshape(K * C1, C0)
    s1v = g1 / jnp.sqrt(rv1 + EPS)
    s1 = s1v.reshape(C1, 1)
    t1 = ((b1 - rm1) * s1v + be1).reshape(C1, 1)

    # AvgPool1d(8,8) pooling matrix (ACC0_W, B*L0P), 1/8 folded in, block-
    # diagonal over the two lane-concatenated samples.
    r = jnp.arange(ACC0_W)
    c = jnp.arange(B * L0P)
    g_r, lw = r // L_PAD, r % L_PAD
    g_c, j = c // L0P, c % L0P
    p0 = jnp.where((g_r[:, None] == g_c[None, :])
                   & ((lw[:, None] // 8) == j[None, :])
                   & (lw[:, None] < L0),
                   1.0 / 8.0, 0.0).astype(jnp.float32)

    # AvgPool(4, stride=2) along length as a (ACC1_W, L1P*B) matrix, 1/4 folded
    # in; output column index = pool_window * B + sample.
    rr = jnp.arange(ACC1_W)
    cc = jnp.arange(L1P * B)
    g_rr, lw1 = rr // L0P, rr % L0P
    l_cc, g_cc = cc // B, cc % B
    p1 = jnp.where((g_rr[:, None] == g_cc[None, :])
                   & (lw1[:, None] >= PS * l_cc[None, :])
                   & (lw1[:, None] < PS * l_cc[None, :] + PW)
                   & (lw1[:, None] < L1),
                   1.0 / PW, 0.0).astype(jnp.float32)

    # fc0 weight split by pool window (PyTorch flatten index = c*L1P + l).
    wf0 = wfc[:, 0::L1P]            # (10, 64): pool window l = 0
    wf1 = wfc[:, 1::L1P]            # (10, 64): pool window l = 1
    bfc_col = bfc.reshape(N_CLASSES, 1)

    packed = (w0s, s0, t0, w1s, s1, t1, p0, p1, wf0, wf1, bfc_col)
    return raw, packed


# ---- plain-JAX reference (mirrors the PyTorch eval-mode forward) -------------
def ref_forward(x_ncl, raw):
    (w0_pt, b0, g0, be0, rm0, rv0, w1_pt, b1, g1, be1, rm1, rv1, wfc, bfc) = raw
    dn = ('NCH', 'OIH', 'NCH')

    y = lax.conv_general_dilated(x_ncl, w0_pt, (1,), 'VALID', dimension_numbers=dn)
    y = y + b0[None, :, None]
    y = ((y - rm0[None, :, None]) / jnp.sqrt(rv0[None, :, None] + EPS)
         * g0[None, :, None] + be0[None, :, None])
    y = jnp.maximum(y, 0.0)
    y = y[:, :, :L0P * 8].reshape(B, C0, L0P, 8).mean(axis=-1)   # AvgPool1d(8, 8)

    y = lax.conv_general_dilated(y, w1_pt, (1,), 'VALID', dimension_numbers=dn)
    y = y + b1[None, :, None]
    y = ((y - rm1[None, :, None]) / jnp.sqrt(rv1[None, :, None] + EPS)
         * g1[None, :, None] + be1[None, :, None])
    y = jnp.maximum(y, 0.0)

    # AvgPool2d(4, stride=2) interpreted along the length axis (see header note)
    y = jnp.stack([y[:, :, l * PS:l * PS + PW].mean(-1) for l in range(L1P)],
                  axis=-1)                                       # (B, 64, 2)
    feat = y.reshape(B, C1 * L1P)
    logits = feat @ wfc.T + bfc
    return jax.nn.log_softmax(logits, axis=-1)


if __name__ == "__main__":
    key = jax.random.PRNGKey(0)
    kx, kp = jax.random.split(key)
    # PyTorch-convention input: (batch, channels=128, length=119)
    x = jax.random.normal(kx, (B, C_IN, L_IN), jnp.float32)
    raw, packed = init_params(kp)

    out = jax.block_until_ready(forward(x, packed))
    ref = ref_forward(x, raw)

    assert out.shape == (B, N_CLASSES)
    assert bool(jnp.all(jnp.isfinite(out)))
    assert bool(jnp.allclose(out, ref, atol=2e-3, rtol=2e-3)), \
        float(jnp.max(jnp.abs(out - ref)))
    print("KERNEL_OK")
</pallas_src>

<mosaic_0001>
module attributes {stable_mosaic.version = 11 : i64} {
  func.func @cnn_kernel(%arg0: memref<2x128x128xf32, #tpu.memory_space<vmem>>, %arg1: memref<256x128xf32, #tpu.memory_space<vmem>>, %arg2: memref<32x1xf32, #tpu.memory_space<vmem>>, %arg3: memref<32x1xf32, #tpu.memory_space<vmem>>, %arg4: memref<512x32xf32, #tpu.memory_space<vmem>>, %arg5: memref<64x1xf32, #tpu.memory_space<vmem>>, %arg6: memref<64x1xf32, #tpu.memory_space<vmem>>, %arg7: memref<240x28xf32, #tpu.memory_space<vmem>>, %arg8: memref<21x4xf32, #tpu.memory_space<vmem>>, %arg9: memref<10x64xf32, #tpu.memory_space<vmem>>, %arg10: memref<10x64xf32, #tpu.memory_space<vmem>>, %arg11: memref<10x1xf32, #tpu.memory_space<vmem>>, %arg12: memref<10x2xf32, #tpu.memory_space<vmem>>) attributes {dimension_semantics = [], scalar_prefetch = 0 : i64, scratch_operands = 0 : i64, tpu.core_type = #tpu.core_type<tc>} {
    %c0 = arith.constant 0 : index
    %c0_0 = arith.constant 0 : index
    %c0_1 = arith.constant 0 : index
    %0 = vector.load %arg0[%c0, %c0_0, %c0_1] : memref<2x128x128xf32, #tpu.memory_space<vmem>>, vector<1x128x128xf32>
    %1 = vector.shape_cast %0 : vector<1x128x128xf32> to vector<128x128xf32>
    %c1 = arith.constant 1 : index
    %c0_2 = arith.constant 0 : index
    %c0_3 = arith.constant 0 : index
    %2 = vector.load %arg0[%c1, %c0_2, %c0_3] : memref<2x128x128xf32, #tpu.memory_space<vmem>>, vector<1x128x128xf32>
    %3 = vector.shape_cast %2 : vector<1x128x128xf32> to vector<128x128xf32>
    %4 = tpu.concatenate %1, %3 in 1 : vector<128x128xf32>, vector<128x128xf32> -> vector<128x256xf32>
    %c0_4 = arith.constant 0 : index
    %c0_5 = arith.constant 0 : index
    %5 = vector.load %arg1[%c0_4, %c0_5] : memref<256x128xf32, #tpu.memory_space<vmem>>, vector<256x128xf32>
    %cst = arith.constant dense<0.000000e+00> : vector<256x256xf32>
    %6 = tpu.matmul %5, %4, %cst {dimension_numbers = #tpu.dot_dimension_numbers<[1], [0], [0], [1], [0, 0, 1, 1], [], []>} : vector<256x128xf32>, vector<128x256xf32>, vector<256x256xf32> -> vector<256x256xf32>
    %7 = vector.extract_strided_slice %6 {offsets = [0, 0], sizes = [32, 240], strides = [1, 1]} : vector<256x256xf32> to vector<32x240xf32>
    %8 = vector.extract_strided_slice %6 {offsets = [32, 1], sizes = [32, 240], strides = [1, 1]} : vector<256x256xf32> to vector<32x240xf32>
    %9 = arith.addf %7, %8 : vector<32x240xf32>
    %10 = vector.extract_strided_slice %6 {offsets = [64, 2], sizes = [32, 240], strides = [1, 1]} : vector<256x256xf32> to vector<32x240xf32>
    %11 = arith.addf %9, %10 : vector<32x240xf32>
    %12 = vector.extract_strided_slice %6 {offsets = [96, 3], sizes = [32, 240], strides = [1, 1]} : vector<256x256xf32> to vector<32x240xf32>
    %13 = arith.addf %11, %12 : vector<32x240xf32>
    %14 = vector.extract_strided_slice %6 {offsets = [128, 4], sizes = [32, 240], strides = [1, 1]} : vector<256x256xf32> to vector<32x240xf32>
    %15 = arith.addf %13, %14 : vector<32x240xf32>
    %16 = vector.extract_strided_slice %6 {offsets = [160, 5], sizes = [32, 240], strides = [1, 1]} : vector<256x256xf32> to vector<32x240xf32>
    %17 = arith.addf %15, %16 : vector<32x240xf32>
    %18 = vector.extract_strided_slice %6 {offsets = [192, 6], sizes = [32, 240], strides = [1, 1]} : vector<256x256xf32> to vector<32x240xf32>
    %19 = arith.addf %17, %18 : vector<32x240xf32>
    %20 = vector.extract_strided_slice %6 {offsets = [224, 7], sizes = [32, 240], strides = [1, 1]} : vector<256x256xf32> to vector<32x240xf32>
    %21 = arith.addf %19, %20 : vector<32x240xf32>
    %c0_6 = arith.constant 0 : index
    %c0_7 = arith.constant 0 : index
    %22 = vector.load %arg2[%c0_6, %c0_7] : memref<32x1xf32, #tpu.memory_space<vmem>>, vector<32x1xf32>
    %23 = vector.broadcast %22 : vector<32x1xf32> to vector<32x240xf32>
    %24 = arith.mulf %21, %23 : vector<32x240xf32>
    %c0_8 = arith.constant 0 : index
    %c0_9 = arith.constant 0 : index
    %25 = vector.load %arg3[%c0_8, %c0_9] : memref<32x1xf32, #tpu.memory_space<vmem>>, vector<32x1xf32>
    %26 = vector.broadcast %25 : vector<32x1xf32> to vector<32x240xf32>
    %27 = arith.addf %24, %26 : vector<32x240xf32>
    %cst_10 = arith.constant 0.000000e+00 : f32
    %28 = vector.broadcast %cst_10 : f32 to vector<32x240xf32>
    %29 = arith.maximumf %27, %28 : vector<32x240xf32>
    %c0_11 = arith.constant 0 : index
    %c0_12 = arith.constant 0 : index
    %30 = vector.load %arg7[%c0_11, %c0_12] : memref<240x28xf32, #tpu.memory_space<vmem>>, vector<240x28xf32>
    %cst_13 = arith.constant dense<0.000000e+00> : vector<32x28xf32>
    %31 = tpu.matmul %29, %30, %cst_13 {dimension_numbers = #tpu.dot_dimension_numbers<[1], [0], [0], [1], [0, 0, 1, 1], [], []>} : vector<32x240xf32>, vector<240x28xf32>, vector<32x28xf32> -> vector<32x28xf32>
    %c0_14 = arith.constant 0 : index
    %c0_15 = arith.constant 0 : index
    %32 = vector.load %arg4[%c0_14, %c0_15] : memref<512x32xf32, #tpu.memory_space<vmem>>, vector<512x32xf32>
    %cst_16 = arith.constant dense<0.000000e+00> : vector<512x28xf32>
    %33 = tpu.matmul %32, %31, %cst_16 {dimension_numbers = #tpu.dot_dimension_numbers<[1], [0], [0], [1], [0, 0, 1, 1], [], []>} : vector<512x32xf32>, vector<32x28xf32>, vector<512x28xf32> -> vector<512x28xf32>
    %34 = vector.extract_strided_slice %33 {offsets = [0, 0], sizes = [64, 21], strides = [1, 1]} : vector<512x28xf32> to vector<64x21xf32>
    %35 = vector.extract_strided_slice %33 {offsets = [64, 1], sizes = [64, 21], strides = [1, 1]} : vector<512x28xf32> to vector<64x21xf32>
    %36 = arith.addf %34, %35 : vector<64x21xf32>
    %37 = vector.extract_strided_slice %33 {offsets = [128, 2], sizes = [64, 21], strides = [1, 1]} : vector<512x28xf32> to vector<64x21xf32>
    %38 = arith.addf %36, %37 : vector<64x21xf32>
    %39 = vector.extract_strided_slice %33 {offsets = [192, 3], sizes = [64, 21], strides = [1, 1]} : vector<512x28xf32> to vector<64x21xf32>
    %40 = arith.addf %38, %39 : vector<64x21xf32>
    %41 = vector.extract_strided_slice %33 {offsets = [256, 4], sizes = [64, 21], strides = [1, 1]} : vector<512x28xf32> to vector<64x21xf32>
    %42 = arith.addf %40, %41 : vector<64x21xf32>
    %43 = vector.extract_strided_slice %33 {offsets = [320, 5], sizes = [64, 21], strides = [1, 1]} : vector<512x28xf32> to vector<64x21xf32>
    %44 = arith.addf %42, %43 : vector<64x21xf32>
    %45 = vector.extract_strided_slice %33 {offsets = [384, 6], sizes = [64, 21], strides = [1, 1]} : vector<512x28xf32> to vector<64x21xf32>
    %46 = arith.addf %44, %45 : vector<64x21xf32>
    %47 = vector.extract_strided_slice %33 {offsets = [448, 7], sizes = [64, 21], strides = [1, 1]} : vector<512x28xf32> to vector<64x21xf32>
    %48 = arith.addf %46, %47 : vector<64x21xf32>
    %c0_17 = arith.constant 0 : index
    %c0_18 = arith.constant 0 : index
    %49 = vector.load %arg5[%c0_17, %c0_18] : memref<64x1xf32, #tpu.memory_space<vmem>>, vector<64x1xf32>
    %50 = vector.broadcast %49 : vector<64x1xf32> to vector<64x21xf32>
    %51 = arith.mulf %48, %50 : vector<64x21xf32>
    %c0_19 = arith.constant 0 : index
    %c0_20 = arith.constant 0 : index
    %52 = vector.load %arg6[%c0_19, %c0_20] : memref<64x1xf32, #tpu.memory_space<vmem>>, vector<64x1xf32>
    %53 = vector.broadcast %52 : vector<64x1xf32> to vector<64x21xf32>
    %54 = arith.addf %51, %53 : vector<64x21xf32>
    %cst_21 = arith.constant 0.000000e+00 : f32
    %55 = vector.broadcast %cst_21 : f32 to vector<64x21xf32>
    %56 = arith.maximumf %54, %55 : vector<64x21xf32>
    %c0_22 = arith.constant 0 : index
    %c0_23 = arith.constant 0 : index
    %57 = vector.load %arg8[%c0_22, %c0_23] : memref<21x4xf32, #tpu.memory_space<vmem>>, vector<21x4xf32>
    %cst_24 = arith.constant dense<0.000000e+00> : vector<64x4xf32>
    %58 = tpu.matmul %56, %57, %cst_24 {dimension_numbers = #tpu.dot_dimension_numbers<[1], [0], [0], [1], [0, 0, 1, 1], [], []>} : vector<64x21xf32>, vector<21x4xf32>, vector<64x4xf32> -> vector<64x4xf32>
    %c0_25 = arith.constant 0 : index
    %c0_26 = arith.constant 0 : index
    %59 = vector.load %arg9[%c0_25, %c0_26] : memref<10x64xf32, #tpu.memory_space<vmem>>, vector<10x64xf32>
    %60 = vector.extract_strided_slice %58 {offsets = [0, 0], sizes = [64, 2], strides = [1, 1]} : vector<64x4xf32> to vector<64x2xf32>
    %cst_27 = arith.constant dense<0.000000e+00> : vector<10x2xf32>
    %61 = tpu.matmul %59, %60, %cst_27 {dimension_numbers = #tpu.dot_dimension_numbers<[1], [0], [0], [1], [0, 0, 1, 1], [], []>} : vector<10x64xf32>, vector<64x2xf32>, vector<10x2xf32> -> vector<10x2xf32>
    %c0_28 = arith.constant 0 : index
    %c0_29 = arith.constant 0 : index
    %62 = vector.load %arg10[%c0_28, %c0_29] : memref<10x64xf32, #tpu.memory_space<vmem>>, vector<10x64xf32>
    %63 = vector.extract_strided_slice %58 {offsets = [0, 2], sizes = [64, 2], strides = [1, 1]} : vector<64x4xf32> to vector<64x2xf32>
    %cst_30 = arith.constant dense<0.000000e+00> : vector<10x2xf32>
    %64 = tpu.matmul %62, %63, %cst_30 {dimension_numbers = #tpu.dot_dimension_numbers<[1], [0], [0], [1], [0, 0, 1, 1], [], []>} : vector<10x64xf32>, vector<64x2xf32>, vector<10x2xf32> -> vector<10x2xf32>
    %65 = arith.addf %61, %64 : vector<10x2xf32>
    %c0_31 = arith.constant 0 : index
    %c0_32 = arith.constant 0 : index
    %66 = vector.load %arg11[%c0_31, %c0_32] : memref<10x1xf32, #tpu.memory_space<vmem>>, vector<10x1xf32>
    %67 = vector.broadcast %66 : vector<10x1xf32> to vector<10x2xf32>
    %68 = arith.addf %65, %67 : vector<10x2xf32>
    %cst_33 = arith.constant dense<0xFF800000> : vector<2xf32>
    %69 = vector.multi_reduction <maximumf>, %68, %cst_33 [0] : vector<10x2xf32> to vector<2xf32>
    %70 = vector.shape_cast %69 : vector<2xf32> to vector<1x2xf32>
    %71 = vector.broadcast %70 : vector<1x2xf32> to vector<10x2xf32>
    %72 = arith.subf %68, %71 : vector<10x2xf32>
    %73 = math.exp %72 : vector<10x2xf32>
    %cst_34 = arith.constant dense<0.000000e+00> : vector<2xf32>
    %74 = vector.multi_reduction <add>, %73, %cst_34 [0] : vector<10x2xf32> to vector<2xf32>
    %75 = vector.shape_cast %74 : vector<2xf32> to vector<1x2xf32>
    %76 = math.log %75 : vector<1x2xf32>
    %77 = vector.broadcast %76 : vector<1x2xf32> to vector<10x2xf32>
    %78 = arith.subf %72, %77 : vector<10x2xf32>
    %c0_35 = arith.constant 0 : index
    %c0_36 = arith.constant 0 : index
    %79 = vector.load %arg12[%c0_35, %c0_36] : memref<10x2xf32, #tpu.memory_space<vmem>>, vector<10x2xf32>
    tpu.vector_store %arg12[%c0_35, %c0_36], %78 {strides = array<i32>} : memref<10x2xf32, #tpu.memory_space<vmem>>, vector<10x2xf32>,
    return
  }
}

</mosaic_0001>

<llo_original>
// kernel: forward.1
$region0: #{forward.1}
  #allocation0 [shape = 'u32[]', space=smem, size = 0x4, offset = 0x4, fixed_abs, tag = 'smem constant byte address 0x4 - core index']
  #allocation1 [shape = 'u32[144,128]{1,0:T(1,128)}', space=vmem, size = 0x12000, scoped, tag = 'internal scratch']
  %s0 = inlined_call_operand.vmem [shape: f32[2,128,128], index: 0, kind: input, shape index: {}]
  %s1 = inlined_call_operand.vmem [shape: f32[256,128], index: 1, kind: input, shape index: {}]
  %s2 = inlined_call_operand.vmem [shape: f32[32,1], index: 2, kind: input, shape index: {}]
  %s3 = inlined_call_operand.vmem [shape: f32[32,1], index: 3, kind: input, shape index: {}]
  %s4 = inlined_call_operand.vmem [shape: f32[512,32], index: 4, kind: input, shape index: {}]
  %s5 = inlined_call_operand.vmem [shape: f32[64,1], index: 5, kind: input, shape index: {}]
  %s6 = inlined_call_operand.vmem [shape: f32[64,1], index: 6, kind: input, shape index: {}]
  %s7 = inlined_call_operand.vmem [shape: f32[240,28], index: 7, kind: input, shape index: {}]
  %s8 = inlined_call_operand.vmem [shape: f32[21,4], index: 8, kind: input, shape index: {}]
  %s9 = inlined_call_operand.vmem [shape: f32[10,64], index: 9, kind: input, shape index: {}]
  %s10 = inlined_call_operand.vmem [shape: f32[10,64], index: 10, kind: input, shape index: {}]
  %s11 = inlined_call_operand.vmem [shape: f32[10,1], index: 11, kind: input, shape index: {}]
  %s12 = inlined_call_operand.vmem [shape: f32[10,2], index: 12, kind: output, shape index: {}]
  %s13 = sld [smem:[#allocation0]]
  $region58: #{forward.1} parent=0
    _
  %s15 = ssub.s32 1, %s13
  %s16 = scalar_select 0, %s15, %s13
  // Predicated region
  $region2: #{forward.1} parent=0 // pred_check
    _
  $region3: #{forward.1} parent=0 // pred_check_branch
    %18 = sbr.rel (0) target = $region5
  $region4: #{forward.1} parent=0 // pred_region
    _
  $region5: #{forward.1} parent=0 // pred_fallthru
    _
  // Predicated region
  $region6: #{forward.1} parent=0 // pred_check
    _
  $region7: #{forward.1} parent=0 // pred_check_branch
    %20 = sbr.rel (0) target = $region9
  $region8: #{forward.1} parent=0 // pred_region
    _
  $region9: #{forward.1} parent=0 // pred_fallthru
    _
  // Predicated region
  $region10: #{forward.1} parent=0 // pred_check
    _
  $region11: #{forward.1} parent=0 // pred_check_branch
    %22 = sbr.rel (0) target = $region13
  $region12: #{forward.1} parent=0 // pred_region
    _
  $region13: #{forward.1} parent=0 // pred_fallthru
    _
  // Predicated region
  $region14: #{forward.1} parent=0 // pred_check
    _
  $region15: #{forward.1} parent=0 // pred_check_branch
    %24 = sbr.rel (0) target = $region17
  $region16: #{forward.1} parent=0 // pred_region
    _
  $region17: #{forward.1} parent=0 // pred_fallthru
    _
  // Predicated region
  $region18: #{forward.1} parent=0 // pred_check
    _
  $region19: #{forward.1} parent=0 // pred_check_branch
    %26 = sbr.rel (0) target = $region21
  $region20: #{forward.1} parent=0 // pred_region
    _
  $region21: #{forward.1} parent=0 // pred_fallthru
    _
  // Predicated region
  $region22: #{forward.1} parent=0 // pred_check
    _
  $region23: #{forward.1} parent=0 // pred_check_branch
    %28 = sbr.rel (0) target = $region25
  $region24: #{forward.1} parent=0 // pred_region
    _
  $region25: #{forward.1} parent=0 // pred_fallthru
    _
  // Predicated region
  $region26: #{forward.1} parent=0 // pred_check
    _
  $region27: #{forward.1} parent=0 // pred_check_branch
    %30 = sbr.rel (0) target = $region29
  $region28: #{forward.1} parent=0 // pred_region
    _
  $region29: #{forward.1} parent=0 // pred_fallthru
    _
  // Predicated region
  $region30: #{forward.1} parent=0 // pred_check
    _
  $region31: #{forward.1} parent=0 // pred_check_branch
    %32 = sbr.rel (0) target = $region33
  $region32: #{forward.1} parent=0 // pred_region
    _
  $region33: #{forward.1} parent=0 // pred_fallthru
    _
  // Predicated region
  $region34: #{forward.1} parent=0 // pred_check
    _
  $region35: #{forward.1} parent=0 // pred_check_branch
    %34 = sbr.rel (0) target = $region37
  $region36: #{forward.1} parent=0 // pred_region
    _
  $region37: #{forward.1} parent=0 // pred_fallthru
    _
  // Predicated region
  $region38: #{forward.1} parent=0 // pred_check
    _
  $region39: #{forward.1} parent=0 // pred_check_branch
    %36 = sbr.rel (0) target = $region41
  $region40: #{forward.1} parent=0 // pred_region
    _
  $region41: #{forward.1} parent=0 // pred_fallthru
    _
  // Predicated region
  $region42: #{forward.1} parent=0 // pred_check
    _
  $region43: #{forward.1} parent=0 // pred_check_branch
    %38 = sbr.rel (0) target = $region45
  $region44: #{forward.1} parent=0 // pred_region
    _
  $region45: #{forward.1} parent=0 // pred_fallthru
    _
  // Predicated region
  $region46: #{forward.1} parent=0 // pred_check
    _
  $region47: #{forward.1} parent=0 // pred_check_branch
    %40 = sbr.rel (0) target = $region49
  $region48: #{forward.1} parent=0 // pred_region
    _
  $region49: #{forward.1} parent=0 // pred_fallthru
    _
  %v41 = vld [vmem:[%s0] sm:$0xff]
  %v42 = vld [vmem:[%s0 + $0x8] sm:$0xff]
  %v43 = vld [vmem:[%s0 + $0x10] sm:$0xff]
  %v44 = vld [vmem:[%s0 + $0x18] sm:$0xff]
  %v45 = vld [vmem:[%s0 + $0x20] sm:$0xff]
  %v46 = vld [vmem:[%s0 + $0x28] sm:$0xff]
  %v47 = vld [vmem:[%s0 + $0x30] sm:$0xff]
  %v48 = vld [vmem:[%s0 + $0x38] sm:$0xff]
  %v49 = vld [vmem:[%s0 + $0x40] sm:$0xff]
  %v50 = vld [vmem:[%s0 + $0x48] sm:$0xff]
  %v51 = vld [vmem:[%s0 + $0x50] sm:$0xff]
  %v52 = vld [vmem:[%s0 + $0x58] sm:$0xff]
  %v53 = vld [vmem:[%s0 + $0x60] sm:$0xff]
  %v54 = vld [vmem:[%s0 + $0x68] sm:$0xff]
  %v55 = vld [vmem:[%s0 + $0x70] sm:$0xff]
  %v56 = vld [vmem:[%s0 + $0x78] sm:$0xff]
  %s57 = scalar_lea.vmem %s0, 128
  %v58 = vld [vmem:[%s57] sm:$0xff]
  %v59 = vld [vmem:[%s57 + $0x8] sm:$0xff]
  %v60 = vld [vmem:[%s57 + $0x10] sm:$0xff]
  %v61 = vld [vmem:[%s57 + $0x18] sm:$0xff]
  %v62 = vld [vmem:[%s57 + $0x20] sm:$0xff]
  %v63 = vld [vmem:[%s57 + $0x28] sm:$0xff]
  %v64 = vld [vmem:[%s57 + $0x30] sm:$0xff]
  %v65 = vld [vmem:[%s57 + $0x38] sm:$0xff]
  %v66 = vld [vmem:[%s57 + $0x40] sm:$0xff]
  %v67 = vld [vmem:[%s57 + $0x48] sm:$0xff]
  %v68 = vld [vmem:[%s57 + $0x50] sm:$0xff]
  %v69 = vld [vmem:[%s57 + $0x58] sm:$0xff]
  %v70 = vld [vmem:[%s57 + $0x60] sm:$0xff]
  %v71 = vld [vmem:[%s57 + $0x68] sm:$0xff]
  %v72 = vld [vmem:[%s57 + $0x70] sm:$0xff]
  %v73 = vld [vmem:[%s57 + $0x78] sm:$0xff]
  %v74 = vld [vmem:[%s1] sm:$0xff]
  %v75 = vld [vmem:[%s1 + $0x8] sm:$0xff]
  %v76 = vld [vmem:[%s1 + $0x10] sm:$0xff]
  %v77 = vld [vmem:[%s1 + $0x18] sm:$0xff]
  %v78 = vld [vmem:[%s1 + $0x20] sm:$0xff]
  %v79 = vld [vmem:[%s1 + $0x28] sm:$0xff]
  %v80 = vld [vmem:[%s1 + $0x30] sm:$0xff]
  %v81 = vld [vmem:[%s1 + $0x38] sm:$0xff]
  %v82 = vld [vmem:[%s1 + $0x40] sm:$0xff]
  %v83 = vld [vmem:[%s1 + $0x48] sm:$0xff]
  %v84 = vld [vmem:[%s1 + $0x50] sm:$0xff]
  %v85 = vld [vmem:[%s1 + $0x58] sm:$0xff]
  %v86 = vld [vmem:[%s1 + $0x60] sm:$0xff]
  %v87 = vld [vmem:[%s1 + $0x68] sm:$0xff]
  %v88 = vld [vmem:[%s1 + $0x70] sm:$0xff]
  %v89 = vld [vmem:[%s1 + $0x78] sm:$0xff]
  %v90 = vld [vmem:[%s1 + $0x80] sm:$0xff]
  %v91 = vld [vmem:[%s1 + $0x88] sm:$0xff]
  %v92 = vld [vmem:[%s1 + $0x90] sm:$0xff]
  %v93 = vld [vmem:[%s1 + $0x98] sm:$0xff]
  %v94 = vld [vmem:[%s1 + $0xa0] sm:$0xff]
  %v95 = vld [vmem:[%s1 + $0xa8] sm:$0xff]
  %v96 = vld [vmem:[%s1 + $0xb0] sm:$0xff]
  %v97 = vld [vmem:[%s1 + $0xb8] sm:$0xff]
  %v98 = vld [vmem:[%s1 + $0xc0] sm:$0xff]
  %v99 = vld [vmem:[%s1 + $0xc8] sm:$0xff]
  %v100 = vld [vmem:[%s1 + $0xd0] sm:$0xff]
  %v101 = vld [vmem:[%s1 + $0xd8] sm:$0xff]
  %v102 = vld [vmem:[%s1 + $0xe0] sm:$0xff]
  %v103 = vld [vmem:[%s1 + $0xe8] sm:$0xff]
  %v104 = vld [vmem:[%s1 + $0xf0] sm:$0xff]
  %v105 = vld [vmem:[%s1 + $0xf8] sm:$0xff]
  %106 = vmatprep.subr.mxu0 %v58
  %107 = vmatpush1.msra.mxu0 %v41
  %108 = vmatprep.subr.mxu0 %v59
  %109 = vmatpush1.msra.mxu0 %v42
  %110 = vmatprep.subr.mxu0 %v60
  %111 = vmatpush1.msra.mxu0 %v43
  %112 = vmatprep.subr.mxu0 %v61
  %113 = vmatpush1.msra.mxu0 %v44
  %114 = vmatprep.subr.mxu0 %v62
  %115 = vmatpush1.msra.mxu0 %v45
  %116 = vmatprep.subr.mxu0 %v63
  %117 = vmatpush1.msra.mxu0 %v46
  %118 = vmatprep.subr.mxu0 %v64
  %119 = vmatpush1.msra.mxu0 %v47
  %120 = vmatprep.subr.mxu0 %v65
  %121 = vmatpush1.msra.mxu0 %v48
  %122 = vmatprep.subr.mxu0 %v66
  %123 = vmatpush1.msra.mxu0 %v49
  %124 = vmatprep.subr.mxu0 %v67
  %125 = vmatpush1.msra.mxu0 %v50
  %126 = vmatprep.subr.mxu0 %v68
  %127 = vmatpush1.msra.mxu0 %v51
  %128 = vmatprep.subr.mxu0 %v69
  %129 = vmatpush1.msra.mxu0 %v52
  %130 = vmatprep.subr.mxu0 %v70
  %131 = vmatpush1.msra.mxu0 %v53
  %132 = vmatprep.subr.mxu0 %v71
  %133 = vmatpush1.msra.mxu0 %v54
  %134 = vmatprep.subr.mxu0 %v72
  %135 = vmatpush1.msra.mxu0 %v55
  %136 = vmatprep.subr.mxu0 %v73
  %137 = vmatpush1.msra.mxu0 %v56
  %138 = vmatprep.subr.mxu0 0.0
  %139 = vmatpush1.msra.mxu0 0.0
  %140 = vmatprep.subr.mxu0 0.0
  %141 = vmatpush1.msra.mxu0 0.0
  %142 = vmatprep.subr.mxu0 0.0
  %143 = vmatpush1.msra.mxu0 0.0
  %144 = vmatprep.subr.mxu0 0.0
  %145 = vmatpush1.msra.mxu0 0.0
  %146 = vmatprep.subr.mxu0 0.0
  %147 = vmatpush1.msra.mxu0 0.0
  %148 = vmatprep.subr.mxu0 0.0
  %149 = vmatpush1.msra.mxu0 0.0
  %150 = vmatprep.subr.mxu0 0.0
  %151 = vmatpush1.msra.mxu0 0.0
  %152 = vmatprep.subr.mxu0 0.0
  %153 = vmatpush1.msra.mxu0 0.0
  %154 = vmatprep.subr.mxu0 0.0
  %155 = vmatpush1.msra.mxu0 0.0
  %156 = vmatprep.subr.mxu0 0.0
  %157 = vmatpush1.msra.mxu0 0.0
  %158 = vmatprep.subr.mxu0 0.0
  %159 = vmatpush1.msra.mxu0 0.0
  %160 = vmatprep.subr.mxu0 0.0
  %161 = vmatpush1.msra.mxu0 0.0
  %162 = vmatprep.subr.mxu0 0.0
  %163 = vmatpush1.msra.mxu0 0.0
  %164 = vmatprep.subr.mxu0 0.0
  %165 = vmatpush1.msra.mxu0 0.0
  %166 = vmatprep.subr.mxu0 0.0
  %167 = vmatpush1.msra.mxu0 0.0
  %168 = vmatprep.subr.mxu0 0.0
  %169 = vmatpush1.msra.mxu0 0.0
  %170 = vmatprep.mubr.f32.mxu0 0.0
  %171 = vmatmul.mubr.f32.gmra.mrb[0].mxu0 %v74
  %v172 = vpop.f32.mrb[0].mxu0
  %v173 = vadd.f32 0.0, %v172
  %v174 = vpop.f32.mrb[0].mxu0
  %v175 = vadd.f32 0.0, %v174
  %176 = vmatprep.mubr.f32.mxu0 0.0
  %177 = vmatmul.mubr.f32.gmra.mrb[0].mxu0 %v75
  %v178 = vpop.f32.mrb[0].mxu0
  %v179 = vadd.f32 0.0, %v178
  %v180 = vpop.f32.mrb[0].mxu0
  %v181 = vadd.f32 0.0, %v180
  %182 = vmatprep.mubr.f32.mxu0 0.0
  %183 = vmatmul.mubr.f32.gmra.mrb[0].mxu0 %v76
  %v184 = vpop.f32.mrb[0].mxu0
  %v185 = vadd.f32 0.0, %v184
  %v186 = vpop.f32.mrb[0].mxu0
  %v187 = vadd.f32 0.0, %v186
  %188 = vmatprep.mubr.f32.mxu0 0.0
  %189 = vmatmul.mubr.f32.gmra.mrb[0].mxu0 %v77
  %v190 = vpop.f32.mrb[0].mxu0
  %v191 = vadd.f32 0.0, %v190
  %v192 = vpop.f32.mrb[0].mxu0
  %v193 = vadd.f32 0.0, %v192
  %194 = vmatprep.mubr.f32.mxu0 0.0
  %195 = vmatmul.mubr.f32.gmra.mrb[0].mxu0 %v78
  %v196 = vpop.f32.mrb[0].mxu0
  %v197 = vadd.f32 0.0, %v196
  %v198 = vpop.f32.mrb[0].mxu0
  %v199 = vadd.f32 0.0, %v198
  %200 = vmatprep.mubr.f32.mxu0 0.0
  %201 = vmatmul.mubr.f32.gmra.mrb[0].mxu0 %v79
  %v202 = vpop.f32.mrb[0].mxu0
  %v203 = vadd.f32 0.0, %v202
  %v204 = vpop.f32.mrb[0].mxu0
  %v205 = vadd.f32 0.0, %v204
  %206 = vmatprep.mubr.f32.mxu0 0.0
  %207 = vmatmul.mubr.f32.gmra.mrb[0].mxu0 %v80
  %v208 = vpop.f32.mrb[0].mxu0
  %v209 = vadd.f32 0.0, %v208
  %v210 = vpop.f32.mrb[0].mxu0
  %v211 = vadd.f32 0.0, %v210
  %212 = vmatprep.mubr.f32.mxu0 0.0
  %213 = vmatmul.mubr.f32.gmra.mrb[0].mxu0 %v81
  %v214 = vpop.f32.mrb[0].mxu0
  %v215 = vadd.f32 0.0, %v214
  %v216 = vpop.f32.mrb[0].mxu0
  %v217 = vadd.f32 0.0, %v216
  %218 = vmatprep.mubr.f32.mxu0 0.0
  %219 = vmatmul.mubr.f32.gmra.mrb[0].mxu0 %v82
  %v220 = vpop.f32.mrb[0].mxu0
  %v221 = vadd.f32 0.0, %v220
  %v222 = vpop.f32.mrb[0].mxu0
  %v223 = vadd.f32 0.0, %v222
  %224 = vmatprep.mubr.f32.mxu0 0.0
  %225 = vmatmul.mubr.f32.gmra.mrb[0].mxu0 %v83
  %v226 = vpop.f32.mrb[0].mxu0
  %v227 = vadd.f32 0.0, %v226
  %v228 = vpop.f32.mrb[0].mxu0
  %v229 = vadd.f32 0.0, %v228
  %230 = vmatprep.mubr.f32.mxu0 0.0
  %231 = vmatmul.mubr.f32.gmra.mrb[0].mxu0 %v84
  %v232 = vpop.f32.mrb[0].mxu0
  %v233 = vadd.f32 0.0, %v232
  %v234 = vpop.f32.mrb[0].mxu0
  %v235 = vadd.f32 0.0, %v234
  %236 = vmatprep.mubr.f32.mxu0 0.0
  %237 = vmatmul.mubr.f32.gmra.mrb[0].mxu0 %v85
  %v238 = vpop.f32.mrb[0].mxu0
  %v239 = vadd.f32 0.0, %v238
  %v240 = vpop.f32.mrb[0].mxu0
  %v241 = vadd.f32 0.0, %v240
  %242 = vmatprep.mubr.f32.mxu0 0.0
  %243 = vmatmul.mubr.f32.gmra.mrb[0].mxu0 %v86
  %v244 = vpop.f32.mrb[0].mxu0
  %v245 = vadd.f32 0.0, %v244
  %v246 = vpop.f32.mrb[0].mxu0
  %v247 = vadd.f32 0.0, %v246
  %248 = vmatprep.mubr.f32.mxu0 0.0
  %249 = vmatmul.mubr.f32.gmra.mrb[0].mxu0 %v87
  %v250 = vpop.f32.mrb[0].mxu0
  %v251 = vadd.f32 0.0, %v250
  %v252 = vpop.f32.mrb[0].mxu0
  %v253 = vadd.f32 0.0, %v252
  %254 = vmatprep.mubr.f32.mxu0 0.0
  %255 = vmatmul.mubr.f32.gmra.mrb[0].mxu0 %v88
  %v256 = vpop.f32.mrb[0].mxu0
  %v257 = vadd.f32 0.0, %v256
  %v258 = vpop.f32.mrb[0].mxu0
  %v259 = vadd.f32 0.0, %v258
  %260 = vmatprep.mubr.f32.mxu0 0.0
  %261 = vmatmul.mubr.f32.gmra.mrb[0].mxu0 %v89
  %v262 = vpop.f32.mrb[0].mxu0
  %v263 = vadd.f32 0.0, %v262
  %v264 = vpop.f32.mrb[0].mxu0
  %v265 = vadd.f32 0.0, %v264
  %266 = vmatprep.mubr.f32.mxu0 0.0
  %267 = vmatmul.mubr.f32.gmra.mrb[0].mxu0 %v90
  %v268 = vpop.f32.mrb[0].mxu0
  %v269 = vadd.f32 0.0, %v268
  %v270 = vpop.f32.mrb[0].mxu0
  %v271 = vadd.f32 0.0, %v270
  %272 = vmatprep.mubr.f32.mxu0 0.0
  %273 = vmatmul.mubr.f32.gmra.mrb[0].mxu0 %v91
  %v274 = vpop.f32.mrb[0].mxu0
  %v275 = vadd.f32 0.0, %v274
  %v276 = vpop.f32.mrb[0].mxu0
  %v277 = vadd.f32 0.0, %v276
  %278 = vmatprep.mubr.f32.mxu0 0.0
  %279 = vmatmul.mubr.f32.gmra.mrb[0].mxu0 %v92
  %v280 = vpop.f32.mrb[0].mxu0
  %v281 = vadd.f32 0.0, %v280
  %v282 = vpop.f32.mrb[0].mxu0
  %v283 = vadd.f32 0.0, %v282
  %284 = vmatprep.mubr.f32.mxu0 0.0
  %285 = vmatmul.mubr.f32.gmra.mrb[0].mxu0 %v93
  %v286 = vpop.f32.mrb[0].mxu0
  %v287 = vadd.f32 0.0, %v286
  %v288 = vpop.f32.mrb[0].mxu0
  %v289 = vadd.f32 0.0, %v288
  %290 = vmatprep.mubr.f32.mxu0 0.0
  %291 = vmatmul.mubr.f32.gmra.mrb[0].mxu0 %v94
  %v292 = vpop.f32.mrb[0].mxu0
  %v293 = vadd.f32 0.0, %v292
  %v294 = vpop.f32.mrb[0].mxu0
  %v295 = vadd.f32 0.0, %v294
  %296 = vmatprep.mubr.f32.mxu0 0.0
  %297 = vmatmul.mubr.f32.gmra.mrb[0].mxu0 %v95
  %v298 = vpop.f32.mrb[0].mxu0
  %v299 = vadd.f32 0.0, %v298
  %v300 = vpop.f32.mrb[0].mxu0
  %v301 = vadd.f32 0.0, %v300
  %302 = vmatprep.mubr.f32.mxu0 0.0
  %303 = vmatmul.mubr.f32.gmra.mrb[0].mxu0 %v96
  %v304 = vpop.f32.mrb[0].mxu0
  %v305 = vadd.f32 0.0, %v304
  %v306 = vpop.f32.mrb[0].mxu0
  %v307 = vadd.f32 0.0, %v306
  %308 = vmatprep.mubr.f32.mxu0 0.0
  %309 = vmatmul.mubr.f32.gmra.mrb[0].mxu0 %v97
  %v310 = vpop.f32.mrb[0].mxu0
  %v311 = vadd.f32 0.0, %v310
  %v312 = vpop.f32.mrb[0].mxu0
  %v313 = vadd.f32 0.0, %v312
  %314 = vmatprep.mubr.f32.mxu0 0.0
  %315 = vmatmul.mubr.f32.gmra.mrb[0].mxu0 %v98
  %v316 = vpop.f32.mrb[0].mxu0
  %v317 = vadd.f32 0.0, %v316
  %v318 = vpop.f32.mrb[0].mxu0
  %v319 = vadd.f32 0.0, %v318
  %320 = vmatprep.mubr.f32.mxu0 0.0
  %321 = vmatmul.mubr.f32.gmra.mrb[0].mxu0 %v99
  %v322 = vpop.f32.mrb[0].mxu0
  %v323 = vadd.f32 0.0, %v322
  %v324 = vpop.f32.mrb[0].mxu0
  %v325 = vadd.f32 0.0, %v324
  %326 = vmatprep.mubr.f32.mxu0 0.0
  %327 = vmatmul.mubr.f32.gmra.mrb[0].mxu0 %v100
  %v328 = vpop.f32.mrb[0].mxu0
  %v329 = vadd.f32 0.0, %v328
  %v330 = vpop.f32.mrb[0].mxu0
  %v331 = vadd.f32 0.0, %v330
  %332 = vmatprep.mubr.f32.mxu0 0.0
  %333 = vmatmul.mubr.f32.gmra.mrb[0].mxu0 %v101
  %v334 = vpop.f32.mrb[0].mxu0
  %v335 = vadd.f32 0.0, %v334
  %v336 = vpop.f32.mrb[0].mxu0
  %v337 = vadd.f32 0.0, %v336
  %338 = vmatprep.mubr.f32.mxu0 0.0
  %339 = vmatmul.mubr.f32.gmra.mrb[0].mxu0 %v102
  %v340 = vpop.f32.mrb[0].mxu0
  %v341 = vadd.f32 0.0, %v340
  %v342 = vpop.f32.mrb[0].mxu0
  %v343 = vadd.f32 0.0, %v342
  %344 = vmatprep.mubr.f32.mxu0 0.0
  %345 = vmatmul.mubr.f32.gmra.mrb[0].mxu0 %v103
  %v346 = vpop.f32.mrb[0].mxu0
  %v347 = vadd.f32 0.0, %v346
  %v348 = vpop.f32.mrb[0].mxu0
  %v349 = vadd.f32 0.0, %v348
  %350 = vmatprep.mubr.f32.mxu0 0.0
  %351 = vmatmul.mubr.f32.gmra.mrb[0].mxu0 %v104
  %v352 = vpop.f32.mrb[0].mxu0
  %v353 = vadd.f32 0.0, %v352
  %v354 = vpop.f32.mrb[0].mxu0
  %v355 = vadd.f32 0.0, %v354
  %356 = vmatprep.mubr.f32.mxu0 0.0
  %357 = vmatmul.mubr.f32.gmra.mrb[0].mxu0 %v105
  %v358 = vpop.f32.mrb[0].mxu0
  %v359 = vadd.f32 0.0, %v358
  %v360 = vpop.f32.mrb[0].mxu0
  %v361 = vadd.f32 0.0, %v360
  %362 = vdwg.mxu0
  %371 = vrot.lane.b32.xlu0 %v197, 127
  %v372 = vpop.permute.xlu0 %371
  %373 = vrot.lane.b32.xlu0 %v199, 127
  %v374 = vpop.permute.xlu0 %373
  %375 = vrot.lane.b32.xlu0 %v203, 127
  %v376 = vpop.permute.xlu0 %375
  %377 = vrot.lane.b32.xlu0 %v205, 127
  %v378 = vpop.permute.xlu0 %377
  %379 = vrot.lane.b32.xlu0 %v209, 127
  %v380 = vpop.permute.xlu0 %379
  %381 = vrot.lane.b32.xlu0 %v211, 127
  %v382 = vpop.permute.xlu0 %381
  %383 = vrot.lane.b32.xlu0 %v215, 127
  %v384 = vpop.permute.xlu0 %383
  %385 = vrot.lane.b32.xlu0 %v217, 127
  %v386 = vpop.permute.xlu0 %385
  %vm387 = vcmask 1039360
  %v388 = vsel %vm387, %v372, %v374
  %v389 = vsel %vm387, %v376, %v378
  %v390 = vsel %vm387, %v380, %v382
  %v391 = vsel %vm387, %v384, %v386
  %v400 = vadd.f32 %v173, %v388
  %v401 = vadd.f32 %v175, %v374
  %v402 = vadd.f32 %v179, %v389
  %v403 = vadd.f32 %v181, %v378
  %v404 = vadd.f32 %v185, %v390
  %v405 = vadd.f32 %v187, %v382
  %v406 = vadd.f32 %v191, %v391
  %v407 = vadd.f32 %v193, %v386
  %416 = vrot.lane.b32.xlu0 %v221, 126
  %v417 = vpop.permute.xlu0 %416
  %418 = vrot.lane.b32.xlu0 %v223, 126
  %v419 = vpop.permute.xlu0 %418
  %420 = vrot.lane.b32.xlu0 %v227, 126
  %v421 = vpop.permute.xlu0 %420
  %422 = vrot.lane.b32.xlu0 %v229, 126
  %v423 = vpop.permute.xlu0 %422
  %424 = vrot.lane.b32.xlu0 %v233, 126
  %v425 = vpop.permute.xlu0 %424
  %426 = vrot.lane.b32.xlu0 %v235, 126
  %v427 = vpop.permute.xlu0 %426
  %428 = vrot.lane.b32.xlu0 %v239, 126
  %v429 = vpop.permute.xlu0 %428
  %430 = vrot.lane.b32.xlu0 %v241, 126
  %v431 = vpop.permute.xlu0 %430
  %vm432 = vcmask 1031168
  %v433 = vsel %vm432, %v417, %v419
  %v434 = vsel %vm432, %v421, %v423
  %v435 = vsel %vm432, %v425, %v427
  %v436 = vsel %vm432, %v429, %v431
  %v445 = vadd.f32 %v400, %v433
  %v446 = vadd.f32 %v401, %v419
  %v447 = vadd.f32 %v402, %v434
  %v448 = vadd.f32 %v403, %v423
  %v449 = vadd.f32 %v404, %v435
  %v450 = vadd.f32 %v405, %v427
  %v451 = vadd.f32 %v406, %v436
  %v452 = vadd.f32 %v407, %v431
  %461 = vrot.lane.b32.xlu0 %v245, 125
  %v462 = vpop.permute.xlu0 %461
  %463 = vrot.lane.b32.xlu0 %v247, 125
  %v464 = vpop.permute.xlu0 %463
  %465 = vrot.lane.b32.xlu0 %v251, 125
  %v466 = vpop.permute.xlu0 %465
  %467 = vrot.lane.b32.xlu0 %v253, 125
  %v468 = vpop.permute.xlu0 %467
  %469 = vrot.lane.b32.xlu0 %v257, 125
  %v470 = vpop.permute.xlu0 %469
  %471 = vrot.lane.b32.xlu0 %v259, 125
  %v472 = vpop.permute.xlu0 %471
  %473 = vrot.lane.b32.xlu0 %v263, 125
  %v474 = vpop.permute.xlu0 %473
  %475 = vrot.lane.b32.xlu0 %v265, 125
  %v476 = vpop.permute.xlu0 %475
  %vm477 = vcmask 1022976
  %v478 = vsel %vm477, %v462, %v464
  %v479 = vsel %vm477, %v466, %v468
  %v480 = vsel %vm477, %v470, %v472
  %v481 = vsel %vm477, %v474, %v476
  %v490 = vadd.f32 %v445, %v478
  %v491 = vadd.f32 %v446, %v464
  %v492 = vadd.f32 %v447, %v479
  %v493 = vadd.f32 %v448, %v468
  %v494 = vadd.f32 %v449, %v480
  %v495 = vadd.f32 %v450, %v472
  %v496 = vadd.f32 %v451, %v481
  %v497 = vadd.f32 %v452, %v476
  %506 = vrot.lane.b32.xlu0 %v269, 124
  %v507 = vpop.permute.xlu0 %506
  %508 = vrot.lane.b32.xlu0 %v271, 124
  %v509 = vpop.permute.xlu0 %508
  %510 = vrot.lane.b32.xlu0 %v275, 124
  %v511 = vpop.permute.xlu0 %510
  %512 = vrot.lane.b32.xlu0 %v277, 124
  %v513 = vpop.permute.xlu0 %512
  %514 = vrot.lane.b32.xlu0 %v281, 124
  %v515 = vpop.permute.xlu0 %514
  %516 = vrot.lane.b32.xlu0 %v283, 124
  %v517 = vpop.permute.xlu0 %516
  %518 = vrot.lane.b32.xlu0 %v287, 124
  %v519 = vpop.permute.xlu0 %518
  %520 = vrot.lane.b32.xlu0 %v289, 124
  %v521 = vpop.permute.xlu0 %520
  %vm522 = vcmask 1014784
  %v523 = vsel %vm522, %v507, %v509
  %v524 = vsel %vm522, %v511, %v513
  %v525 = vsel %vm522, %v515, %v517
  %v526 = vsel %vm522, %v519, %v521
  %v535 = vadd.f32 %v490, %v523
  %v536 = vadd.f32 %v491, %v509
  %v537 = vadd.f32 %v492, %v524
  %v538 = vadd.f32 %v493, %v513
  %v539 = vadd.f32 %v494, %v525
  %v540 = vadd.f32 %v495, %v517
  %v541 = vadd.f32 %v496, %v526
  %v542 = vadd.f32 %v497, %v521
  %551 = vrot.lane.b32.xlu0 %v293, 123
  %v552 = vpop.permute.xlu0 %551
  %553 = vrot.lane.b32.xlu0 %v295, 123
  %v554 = vpop.permute.xlu0 %553
  %555 = vrot.lane.b32.xlu0 %v299, 123
  %v556 = vpop.permute.xlu0 %555
  %557 = vrot.lane.b32.xlu0 %v301, 123
  %v558 = vpop.permute.xlu0 %557
  %559 = vrot.lane.b32.xlu0 %v305, 123
  %v560 = vpop.permute.xlu0 %559
  %561 = vrot.lane.b32.xlu0 %v307, 123
  %v562 = vpop.permute.xlu0 %561
  %563 = vrot.lane.b32.xlu0 %v311, 123
  %v564 = vpop.permute.xlu0 %563
  %565 = vrot.lane.b32.xlu0 %v313, 123
  %v566 = vpop.permute.xlu0 %565
  %vm567 = vcmask 1006592
  %v568 = vsel %vm567, %v552, %v554
  %v569 = vsel %vm567, %v556, %v558
  %v570 = vsel %vm567, %v560, %v562
  %v571 = vsel %vm567, %v564, %v566
  %v580 = vadd.f32 %v535, %v568
  %v581 = vadd.f32 %v536, %v554
  %v582 = vadd.f32 %v537, %v569
  %v583 = vadd.f32 %v538, %v558
  %v584 = vadd.f32 %v539, %v570
  %v585 = vadd.f32 %v540, %v562
  %v586 = vadd.f32 %v541, %v571
  %v587 = vadd.f32 %v542, %v566
  %596 = vrot.lane.b32.xlu0 %v317, 122
  %v597 = vpop.permute.xlu0 %596
  %598 = vrot.lane.b32.xlu0 %v319, 122
  %v599 = vpop.permute.xlu0 %598
  %600 = vrot.lane.b32.xlu0 %v323, 122
  %v601 = vpop.permute.xlu0 %600
  %602 = vrot.lane.b32.xlu0 %v325, 122
  %v603 = vpop.permute.xlu0 %602
  %604 = vrot.lane.b32.xlu0 %v329, 122
  %v605 = vpop.permute.xlu0 %604
  %606 = vrot.lane.b32.xlu0 %v331, 122
  %v607 = vpop.permute.xlu0 %606
  %608 = vrot.lane.b32.xlu0 %v335, 122
  %v609 = vpop.permute.xlu0 %608
  %610 = vrot.lane.b32.xlu0 %v337, 122
  %v611 = vpop.permute.xlu0 %610
  %vm612 = vcmask 998400
  %v613 = vsel %vm612, %v597, %v599
  %v614 = vsel %vm612, %v601, %v603
  %v615 = vsel %vm612, %v605, %v607
  %v616 = vsel %vm612, %v609, %v611
  %v625 = vadd.f32 %v580, %v613
  %v626 = vadd.f32 %v581, %v599
  %v627 = vadd.f32 %v582, %v614
  %v628 = vadd.f32 %v583, %v603
  %v629 = vadd.f32 %v584, %v615
  %v630 = vadd.f32 %v585, %v607
  %v631 = vadd.f32 %v586, %v616
  %v632 = vadd.f32 %v587, %v611
  %641 = vrot.lane.b32.xlu0 %v341, 121
  %v642 = vpop.permute.xlu0 %641
  %643 = vrot.lane.b32.xlu0 %v343, 121
  %v644 = vpop.permute.xlu0 %643
  %645 = vrot.lane.b32.xlu0 %v347, 121
  %v646 = vpop.permute.xlu0 %645
  %647 = vrot.lane.b32.xlu0 %v349, 121
  %v648 = vpop.permute.xlu0 %647
  %649 = vrot.lane.b32.xlu0 %v353, 121
  %v650 = vpop.permute.xlu0 %649
  %651 = vrot.lane.b32.xlu0 %v355, 121
  %v652 = vpop.permute.xlu0 %651
  %653 = vrot.lane.b32.xlu0 %v359, 121
  %v654 = vpop.permute.xlu0 %653
  %655 = vrot.lane.b32.xlu0 %v361, 121
  %v656 = vpop.permute.xlu0 %655
  %vm657 = vcmask 990208
  %v658 = vsel %vm657, %v642, %v644
  %v659 = vsel %vm657, %v646, %v648
  %v660 = vsel %vm657, %v650, %v652
  %v661 = vsel %vm657, %v654, %v656
  %v670 = vadd.f32 %v625, %v658
  %v671 = vadd.f32 %v626, %v644
  %v672 = vadd.f32 %v627, %v659
  %v673 = vadd.f32 %v628, %v648
  %v674 = vadd.f32 %v629, %v660
  %v675 = vadd.f32 %v630, %v652
  %v676 = vadd.f32 %v631, %v661
  %v677 = vadd.f32 %v632, %v656
  %v678 = vld [vmem:[%s2] sm:$0xff]
  %v679 = vld [vmem:[%s2 + $0x8] sm:$0xff]
  %v680 = vld [vmem:[%s2 + $0x10] sm:$0xff]
  %v681 = vld [vmem:[%s2 + $0x18] sm:$0xff]
  %683 = vset.pattern.permute.xlu0 0
  %684 = vperm.xlu0 %683, %v678
  %v685 = vpop.permute.xlu0 %684
  %688 = vset.pattern.permute.xlu0 0
  %689 = vperm.xlu0 %688, %v679
  %v690 = vpop.permute.xlu0 %689
  %693 = vset.pattern.permute.xlu0 0
  %694 = vperm.xlu0 %693, %v680
  %v695 = vpop.permute.xlu0 %694
  %698 = vset.pattern.permute.xlu0 0
  %699 = vperm.xlu0 %698, %v681
  %v700 = vpop.permute.xlu0 %699
  %v702 = vmul.f32 %v670, %v685
  %v703 = vmul.f32 %v671, %v685
  %v704 = vmul.f32 %v672, %v690
  %v705 = vmul.f32 %v673, %v690
  %v706 = vmul.f32 %v674, %v695
  %v707 = vmul.f32 %v675, %v695
  %v708 = vmul.f32 %v676, %v700
  %v709 = vmul.f32 %v677, %v700
  %v710 = vld [vmem:[%s3] sm:$0xff]
  %v711 = vld [vmem:[%s3 + $0x8] sm:$0xff]
  %v712 = vld [vmem:[%s3 + $0x10] sm:$0xff]
  %v713 = vld [vmem:[%s3 + $0x18] sm:$0xff]
  %715 = vset.pattern.permute.xlu0 0
  %716 = vperm.xlu0 %715, %v710
  %v717 = vpop.permute.xlu0 %716
  %720 = vset.pattern.permute.xlu0 0
  %721 = vperm.xlu0 %720, %v711
  %v722 = vpop.permute.xlu0 %721
  %725 = vset.pattern.permute.xlu0 0
  %726 = vperm.xlu0 %725, %v712
  %v727 = vpop.permute.xlu0 %726
  %730 = vset.pattern.permute.xlu0 0
  %731 = vperm.xlu0 %730, %v713
  %v732 = vpop.permute.xlu0 %731
  %v734 = vadd.f32 %v702, %v717
  %v735 = vadd.f32 %v703, %v717
  %v736 = vadd.f32 %v704, %v722
  %v737 = vadd.f32 %v705, %v722
  %v738 = vadd.f32 %v706, %v727
  %v739 = vadd.f32 %v707, %v727
  %v740 = vadd.f32 %v708, %v732
  %v741 = vadd.f32 %v709, %v732
  %v742 = vmax.f32 %v734, 0.0
  %v743 = vmax.f32 %v735, 0.0
  %v744 = vmax.f32 %v736, 0.0
  %v745 = vmax.f32 %v737, 0.0
  %v746 = vmax.f32 %v738, 0.0
  %v747 = vmax.f32 %v739, 0.0
  %v748 = vmax.f32 %v740, 0.0
  %v749 = vmax.f32 %v741, 0.0
  %v750 = vld [vmem:[%s7] sm:$0xff]
  %v751 = vld [vmem:[%s7 + $0x8] sm:$0xff]
  %v752 = vld [vmem:[%s7 + $0x10] sm:$0xff]
  %v753 = vld [vmem:[%s7 + $0x18] sm:$0xff]
  %v754 = vld [vmem:[%s7 + $0x20] sm:$0xff]
  %v755 = vld [vmem:[%s7 + $0x28] sm:$0xff]
  %v756 = vld [vmem:[%s7 + $0x30] sm:$0xff]
  %v757 = vld [vmem:[%s7 + $0x38] sm:$0xff]
  %v758 = vld [vmem:[%s7 + $0x40] sm:$0xff]
  %v759 = vld [vmem:[%s7 + $0x48] sm:$0xff]
  %v760 = vld [vmem:[%s7 + $0x50] sm:$0xff]
  %v761 = vld [vmem:[%s7 + $0x58] sm:$0xff]
  %v762 = vld [vmem:[%s7 + $0x60] sm:$0xff]
  %v763 = vld [vmem:[%s7 + $0x68] sm:$0xff]
  %v764 = vld [vmem:[%s7 + $0x70] sm:$0xff]
  %v765 = vld [vmem:[%s7 + $0x78] sm:$0xff]
  %v766 = vld [vmem:[%s7 + $0x80] sm:$0xff]
  %v767 = vld [vmem:[%s7 + $0x88] sm:$0xff]
  %v768 = vld [vmem:[%s7 + $0x90] sm:$0xff]
  %v769 = vld [vmem:[%s7 + $0x98] sm:$0xff]
  %v770 = vld [vmem:[%s7 + $0xa0] sm:$0xff]
  %v771 = vld [vmem:[%s7 + $0xa8] sm:$0xff]
  %v772 = vld [vmem:[%s7 + $0xb0] sm:$0xff]
  %v773 = vld [vmem:[%s7 + $0xb8] sm:$0xff]
  %v774 = vld [vmem:[%s7 + $0xc0] sm:$0xff]
  %v775 = vld [vmem:[%s7 + $0xc8] sm:$0xff]
  %v776 = vld [vmem:[%s7 + $0xd0] sm:$0xff]
  %v777 = vld [vmem:[%s7 + $0xd8] sm:$0xff]
  %v778 = vld [vmem:[%s7 + $0xe0] sm:$0xff]
  %v779 = vld [vmem:[%s7 + $0xe8] sm:$0xff]
  %vm780 = vcmask 916480
  %v782 = vsel %vm780, %v743, 0
  %v785 = vsel %vm780, %v745, 0
  %v788 = vsel %vm780, %v747, 0
  %v791 = vsel %vm780, %v749, 0
  %793 = vmatprep.subr.mxu0 0.0
  %794 = vmatpush1.msra.mxu0 %v750
  %795 = vmatprep.subr.mxu0 0.0
  %796 = vmatpush1.msra.mxu0 %v751
  %797 = vmatprep.subr.mxu0 0.0
  %798 = vmatpush1.msra.mxu0 %v752
  %799 = vmatprep.subr.mxu0 0.0
  %800 = vmatpush1.msra.mxu0 %v753
  %801 = vmatprep.subr.mxu0 0.0
  %802 = vmatpush1.msra.mxu0 %v754
  %803 = vmatprep.subr.mxu0 0.0
  %804 = vmatpush1.msra.mxu0 %v755
  %805 = vmatprep.subr.mxu0 0.0
  %806 = vmatpush1.msra.mxu0 %v756
  %807 = vmatprep.subr.mxu0 0.0
  %808 = vmatpush1.msra.mxu0 %v757
  %809 = vmatprep.subr.mxu0 0.0
  %810 = vmatpush1.msra.mxu0 %v758
  %811 = vmatprep.subr.mxu0 0.0
  %812 = vmatpush1.msra.mxu0 %v759
  %813 = vmatprep.subr.mxu0 0.0
  %814 = vmatpush1.msra.mxu0 %v760
  %815 = vmatprep.subr.mxu0 0.0
  %816 = vmatpush1.msra.mxu0 %v761
  %817 = vmatprep.subr.mxu0 0.0
  %818 = vmatpush1.msra.mxu0 %v762
  %819 = vmatprep.subr.mxu0 0.0
  %820 = vmatpush1.msra.mxu0 %v763
  %821 = vmatprep.subr.mxu0 0.0
  %822 = vmatpush1.msra.mxu0 %v764
  %823 = vmatprep.subr.mxu0 0.0
  %824 = vmatpush1.msra.mxu0 %v765
  %825 = vmatprep.subr.mxu0 0.0
  %826 = vmatpush1.msra.mxu0 %v766
  %827 = vmatprep.subr.mxu0 0.0
  %828 = vmatpush1.msra.mxu0 %v767
  %829 = vmatprep.subr.mxu0 0.0
  %830 = vmatpush1.msra.mxu0 %v768
  %831 = vmatprep.subr.mxu0 0.0
  %832 = vmatpush1.msra.mxu0 %v769
  %833 = vmatprep.subr.mxu0 0.0
  %834 = vmatpush1.msra.mxu0 %v770
  %835 = vmatprep.subr.mxu0 0.0
  %836 = vmatpush1.msra.mxu0 %v771
  %837 = vmatprep.subr.mxu0 0.0
  %838 = vmatpush1.msra.mxu0 %v772
  %839 = vmatprep.subr.mxu0 0.0
  %840 = vmatpush1.msra.mxu0 %v773
  %841 = vmatprep.subr.mxu0 0.0
  %842 = vmatpush1.msra.mxu0 %v774
  %843 = vmatprep.subr.mxu0 0.0
  %844 = vmatpush1.msra.mxu0 %v775
  %845 = vmatprep.subr.mxu0 0.0
  %846 = vmatpush1.msra.mxu0 %v776
  %847 = vmatprep.subr.mxu0 0.0
  %848 = vmatpush1.msra.mxu0 %v777
  %849 = vmatprep.subr.mxu0 0.0
  %850 = vmatpush1.msra.mxu0 %v778
  %851 = vmatprep.subr.mxu0 0.0
  %852 = vmatpush1.msra.mxu0 %v779
  %853 = vmatprep.subr.mxu0 0.0
  %854 = vmatpush1.msra.mxu0 0.0
  %855 = vmatprep.subr.mxu0 0.0
  %856 = vmatpush1.msra.mxu0 0.0
  %857 = vmatprep.mubr.f32.mxu0 %v782
  %858 = vmatmul.mubr.f32.gmra.mrb[0].mxu0 %v742
  %v859 = vpop.f32.mrb[0].mxu0
  %v860 = vadd.f32 0.0, %v859
  %v861 = vpop.f32.mrb[0].mxu0
  %862 = vmatprep.mubr.f32.mxu0 %v785
  %863 = vmatmul.mubr.f32.gmra.mrb[0].mxu0 %v744
  %v864 = vpop.f32.mrb[0].mxu0
  %v865 = vadd.f32 0.0, %v864
  %v866 = vpop.f32.mrb[0].mxu0
  %867 = vmatprep.mubr.f32.mxu0 %v788
  %868 = vmatmul.mubr.f32.gmra.mrb[0].mxu0 %v746
  %v869 = vpop.f32.mrb[0].mxu0
  %v870 = vadd.f32 0.0, %v869
  %v871 = vpop.f32.mrb[0].mxu0
  %872 = vmatprep.mubr.f32.mxu0 %v791
  %873 = vmatmul.mubr.f32.gmra.mrb[0].mxu0 %v748
  %v874 = vpop.f32.mrb[0].mxu0
  %v875 = vadd.f32 0.0, %v874
  %v876 = vpop.f32.mrb[0].mxu0
  %877 = vdwg.mxu0
  %v878 = vld [vmem:[%s4] sm:$0xff]
  %v879 = vld [vmem:[%s4 + $0x8] sm:$0xff]
  %v880 = vld [vmem:[%s4 + $0x10] sm:$0xff]
  %v881 = vld [vmem:[%s4 + $0x18] sm:$0xff]
  %v882 = vld [vmem:[%s4 + $0x20] sm:$0xff]
  %v883 = vld [vmem:[%s4 + $0x28] sm:$0xff]
  %v884 = vld [vmem:[%s4 + $0x30] sm:$0xff]
  %v885 = vld [vmem:[%s4 + $0x38] sm:$0xff]
  %v886 = vld [vmem:[%s4 + $0x40] sm:$0xff]
  %v887 = vld [vmem:[%s4 + $0x48] sm:$0xff]
  %v888 = vld [vmem:[%s4 + $0x50] sm:$0xff]
  %v889 = vld [vmem:[%s4 + $0x58] sm:$0xff]
  %v890 = vld [vmem:[%s4 + $0x60] sm:$0xff]
  %v891 = vld [vmem:[%s4 + $0x68] sm:$0xff]
  %v892 = vld [vmem:[%s4 + $0x70] sm:$0xff]
  %v893 = vld [vmem:[%s4 + $0x78] sm:$0xff]
  %v894 = vld [vmem:[%s4 + $0x80] sm:$0xff]
  %v895 = vld [vmem:[%s4 + $0x88] sm:$0xff]
  %v896 = vld [vmem:[%s4 + $0x90] sm:$0xff]
  %v897 = vld [vmem:[%s4 + $0x98] sm:$0xff]
  %v898 = vld [vmem:[%s4 + $0xa0] sm:$0xff]
  %v899 = vld [vmem:[%s4 + $0xa8] sm:$0xff]
  %v900 = vld [vmem:[%s4 + $0xb0] sm:$0xff]
  %v901 = vld [vmem:[%s4 + $0xb8] sm:$0xff]
  %v902 = vld [vmem:[%s4 + $0xc0] sm:$0xff]
  %v903 = vld [vmem:[%s4 + $0xc8] sm:$0xff]
  %v904 = vld [vmem:[%s4 + $0xd0] sm:$0xff]
  %v905 = vld [vmem:[%s4 + $0xd8] sm:$0xff]
  %v906 = vld [vmem:[%s4 + $0xe0] sm:$0xff]
  %v907 = vld [vmem:[%s4 + $0xe8] sm:$0xff]
  %v908 = vld [vmem:[%s4 + $0xf0] sm:$0xff]
  %v909 = vld [vmem:[%s4 + $0xf8] sm:$0xff]
  %v910 = vld [vmem:[%s4 + $0x100] sm:$0xff]
  %v911 = vld [vmem:[%s4 + $0x108] sm:$0xff]
  %v912 = vld [vmem:[%s4 + $0x110] sm:$0xff]
  %v913 = vld [vmem:[%s4 + $0x118] sm:$0xff]
  %v914 = vld [vmem:[%s4 + $0x120] sm:$0xff]
  %v915 = vld [vmem:[%s4 + $0x128] sm:$0xff]
  %v916 = vld [vmem:[%s4 + $0x130] sm:$0xff]
  %v917 = vld [vmem:[%s4 + $0x138] sm:$0xff]
  %v918 = vld [vmem:[%s4 + $0x140] sm:$0xff]
  %v919 = vld [vmem:[%s4 + $0x148] sm:$0xff]
  %v920 = vld [vmem:[%s4 + $0x150] sm:$0xff]
  %v921 = vld [vmem:[%s4 + $0x158] sm:$0xff]
  %v922 = vld [vmem:[%s4 + $0x160] sm:$0xff]
  %v923 = vld [vmem:[%s4 + $0x168] sm:$0xff]
  %v924 = vld [vmem:[%s4 + $0x170] sm:$0xff]
  %v925 = vld [vmem:[%s4 + $0x178] sm:$0xff]
  %v926 = vld [vmem:[%s4 + $0x180] sm:$0xff]
  %v927 = vld [vmem:[%s4 + $0x188] sm:$0xff]
  %v928 = vld [vmem:[%s4 + $0x190] sm:$0xff]
  %v929 = vld [vmem:[%s4 + $0x198] sm:$0xff]
  %v930 = vld [vmem:[%s4 + $0x1a0] sm:$0xff]
  %v931 = vld [vmem:[%s4 + $0x1a8] sm:$0xff]
  %v932 = vld [vmem:[%s4 + $0x1b0] sm:$0xff]
  %v933 = vld [vmem:[%s4 + $0x1b8] sm:$0xff]
  %v934 = vld [vmem:[%s4 + $0x1c0] sm:$0xff]
  %v935 = vld [vmem:[%s4 + $0x1c8] sm:$0xff]
  %v936 = vld [vmem:[%s4 + $0x1d0] sm:$0xff]
  %v937 = vld [vmem:[%s4 + $0x1d8] sm:$0xff]
  %v938 = vld [vmem:[%s4 + $0x1e0] sm:$0xff]
  %v939 = vld [vmem:[%s4 + $0x1e8] sm:$0xff]
  %v940 = vld [vmem:[%s4 + $0x1f0] sm:$0xff]
  %v941 = vld [vmem:[%s4 + $0x1f8] sm:$0xff]
  %vm942 = vcmask 261120
  %v944 = vsel %vm942, %v878, 0
  %v947 = vsel %vm942, %v879, 0
  %v950 = vsel %vm942, %v880, 0
  %v953 = vsel %vm942, %v881, 0
  %v956 = vsel %vm942, %v882, 0
  %v959 = vsel %vm942, %v883, 0
  %v962 = vsel %vm942, %v884, 0
  %v965 = vsel %vm942, %v885, 0
  %v968 = vsel %vm942, %v886, 0
  %v971 = vsel %vm942, %v887, 0
  %v974 = vsel %vm942, %v888, 0
  %v977 = vsel %vm942, %v889, 0
  %v980 = vsel %vm942, %v890, 0
  %v983 = vsel %vm942, %v891, 0
  %v986 = vsel %vm942, %v892, 0
  %v989 = vsel %vm942, %v893, 0
  %v992 = vsel %vm942, %v894, 0
  %v995 = vsel %vm942, %v895, 0
  %v998 = vsel %vm942, %v896, 0
  %v1001 = vsel %vm942, %v897, 0
  %v1004 = vsel %vm942, %v898, 0
  %v1007 = vsel %vm942, %v899, 0
  %v1010 = vsel %vm942, %v900, 0
  %v1013 = vsel %vm942, %v901, 0
  %v1016 = vsel %vm942, %v902, 0
  %v1019 = vsel %vm942, %v903, 0
  %v1022 = vsel %vm942, %v904, 0
  %v1025 = vsel %vm942, %v905, 0
  %v1028 = vsel %vm942, %v906, 0
  %v1031 = vsel %vm942, %v907, 0
  %v1034 = vsel %vm942, %v908, 0
  %v1037 = vsel %vm942, %v909, 0
  %v1040 = vsel %vm942, %v910, 0
  %v1043 = vsel %vm942, %v911, 0
  %v1046 = vsel %vm942, %v912, 0
  %v1049 = vsel %vm942, %v913, 0
  %v1052 = vsel %vm942, %v914, 0
  %v1055 = vsel %vm942, %v915, 0
  %v1058 = vsel %vm942, %v916, 0
  %v1061 = vsel %vm942, %v917, 0
  %v1064 = vsel %vm942, %v918, 0
  %v1067 = vsel %vm942, %v919, 0
  %v1070 = vsel %vm942, %v920, 0
  %v1073 = vsel %vm942, %v921, 0
  %v1076 = vsel %vm942, %v922, 0
  %v1079 = vsel %vm942, %v923, 0
  %v1082 = vsel %vm942, %v924, 0
  %v1085 = vsel %vm942, %v925, 0
  %v1088 = vsel %vm942, %v926, 0
  %v1091 = vsel %vm942, %v927, 0
  %v1094 = vsel %vm942, %v928, 0
  %v1097 = vsel %vm942, %v929, 0
  %v1100 = vsel %vm942, %v930, 0
  %v1103 = vsel %vm942, %v931, 0
  %v1106 = vsel %vm942, %v932, 0
  %v1109 = vsel %vm942, %v933, 0
  %v1112 = vsel %vm942, %v934, 0
  %v1115 = vsel %vm942, %v935, 0
  %v1118 = vsel %vm942, %v936, 0
  %v1121 = vsel %vm942, %v937, 0
  %v1124 = vsel %vm942, %v938, 0
  %v1127 = vsel %vm942, %v939, 0
  %v1130 = vsel %vm942, %v940, 0
  %v1133 = vsel %vm942, %v941, 0
  %1135 = vmatprep.subr.mxu0 0.0
  %1136 = vmatpush1.msra.mxu0 %v860
  %1137 = vmatprep.subr.mxu0 0.0
  %1138 = vmatpush1.msra.mxu0 %v865
  %1139 = vmatprep.subr.mxu0 0.0
  %1140 = vmatpush1.msra.mxu0 %v870
  %1141 = vmatprep.subr.mxu0 0.0
  %1142 = vmatpush1.msra.mxu0 %v875
  %1143 = vmatprep.subr.mxu0 0.0
  %1144 = vmatpush1.msra.mxu0 0.0
  %1145 = vmatprep.subr.mxu0 0.0
  %1146 = vmatpush1.msra.mxu0 0.0
  %1147 = vmatprep.subr.mxu0 0.0
  %1148 = vmatpush1.msra.mxu0 0.0
  %1149 = vmatprep.subr.mxu0 0.0
  %1150 = vmatpush1.msra.mxu0 0.0
  %1151 = vmatprep.subr.mxu0 0.0
  %1152 = vmatpush1.msra.mxu0 0.0
  %1153 = vmatprep.subr.mxu0 0.0
  %1154 = vmatpush1.msra.mxu0 0.0
  %1155 = vmatprep.subr.mxu0 0.0
  %1156 = vmatpush1.msra.mxu0 0.0
  %1157 = vmatprep.subr.mxu0 0.0
  %1158 = vmatpush1.msra.mxu0 0.0
  %1159 = vmatprep.subr.mxu0 0.0
  %1160 = vmatpush1.msra.mxu0 0.0
  %1161 = vmatprep.subr.mxu0 0.0
  %1162 = vmatpush1.msra.mxu0 0.0
  %1163 = vmatprep.subr.mxu0 0.0
  %1164 = vmatpush1.msra.mxu0 0.0
  %1165 = vmatprep.subr.mxu0 0.0
  %1166 = vmatpush1.msra.mxu0 0.0
  %1167 = vmatprep.subr.mxu0 0.0
  %1168 = vmatpush1.msra.mxu0 0.0
  %1169 = vmatprep.subr.mxu0 0.0
  %1170 = vmatpush1.msra.mxu0 0.0
  %1171 = vmatprep.subr.mxu0 0.0
  %1172 = vmatpush1.msra.mxu0 0.0
  %1173 = vmatprep.subr.mxu0 0.0
  %1174 = vmatpush1.msra.mxu0 0.0
  %1175 = vmatprep.subr.mxu0 0.0
  %1176 = vmatpush1.msra.mxu0 0.0
  %1177 = vmatprep.subr.mxu0 0.0
  %1178 = vmatpush1.msra.mxu0 0.0
  %1179 = vmatprep.subr.mxu0 0.0
  %1180 = vmatpush1.msra.mxu0 0.0
  %1181 = vmatprep.subr.mxu0 0.0
  %1182 = vmatpush1.msra.mxu0 0.0
  %1183 = vmatprep.subr.mxu0 0.0
  %1184 = vmatpush1.msra.mxu0 0.0
  %1185 = vmatprep.subr.mxu0 0.0
  %1186 = vmatpush1.msra.mxu0 0.0
  %1187 = vmatprep.subr.mxu0 0.0
  %1188 = vmatpush1.msra.mxu0 0.0
  %1189 = vmatprep.subr.mxu0 0.0
  %1190 = vmatpush1.msra.mxu0 0.0
  %1191 = vmatprep.subr.mxu0 0.0
  %1192 = vmatpush1.msra.mxu0 0.0
  %1193 = vmatprep.subr.mxu0 0.0
  %1194 = vmatpush1.msra.mxu0 0.0
  %1195 = vmatprep.subr.mxu0 0.0
  %1196 = vmatpush1.msra.mxu0 0.0
  %1197 = vmatprep.subr.mxu0 0.0
  %1198 = vmatpush1.msra.mxu0 0.0
  %1199 = vmatprep.mubr.f32.mxu0 0.0
  %1200 = vmatmul.mubr.f32.gmra.mrb[0].mxu0 %v944
  %v1201 = vpop.f32.mrb[0].mxu0
  %v1202 = vadd.f32 0.0, %v1201
  %v1203 = vpop.f32.mrb[0].mxu0
  %1204 = vmatprep.mubr.f32.mxu0 0.0
  %1205 = vmatmul.mubr.f32.gmra.mrb[0].mxu0 %v947
  %v1206 = vpop.f32.mrb[0].mxu0
  %v1207 = vadd.f32 0.0, %v1206
  %v1208 = vpop.f32.mrb[0].mxu0
  %1209 = vmatprep.mubr.f32.mxu0 0.0
  %1210 = vmatmul.mubr.f32.gmra.mrb[0].mxu0 %v950
  %v1211 = vpop.f32.mrb[0].mxu0
  %v1212 = vadd.f32 0.0, %v1211
  %v1213 = vpop.f32.mrb[0].mxu0
  %1214 = vmatprep.mubr.f32.mxu0 0.0
  %1215 = vmatmul.mubr.f32.gmra.mrb[0].mxu0 %v953
  %v1216 = vpop.f32.mrb[0].mxu0
  %v1217 = vadd.f32 0.0, %v1216
  %v1218 = vpop.f32.mrb[0].mxu0
  %1219 = vmatprep.mubr.f32.mxu0 0.0
  %1220 = vmatmul.mubr.f32.gmra.mrb[0].mxu0 %v956
  %v1221 = vpop.f32.mrb[0].mxu0
  %v1222 = vadd.f32 0.0, %v1221
  %v1223 = vpop.f32.mrb[0].mxu0
  %1224 = vmatprep.mubr.f32.mxu0 0.0
  %1225 = vmatmul.mubr.f32.gmra.mrb[0].mxu0 %v959
  %v1226 = vpop.f32.mrb[0].mxu0
  %v1227 = vadd.f32 0.0, %v1226
  %v1228 = vpop.f32.mrb[0].mxu0
  %1229 = vmatprep.mubr.f32.mxu0 0.0
  %1230 = vmatmul.mubr.f32.gmra.mrb[0].mxu0 %v962
  %v1231 = vpop.f32.mrb[0].mxu0
  %v1232 = vadd.f32 0.0, %v1231
  %v1233 = vpop.f32.mrb[0].mxu0
  %1234 = vmatprep.mubr.f32.mxu0 0.0
  %1235 = vmatmul.mubr.f32.gmra.mrb[0].mxu0 %v965
  %v1236 = vpop.f32.mrb[0].mxu0
  %v1237 = vadd.f32 0.0, %v1236
  %v1238 = vpop.f32.mrb[0].mxu0
  %1239 = vmatprep.mubr.f32.mxu0 0.0
  %1240 = vmatmul.mubr.f32.gmra.mrb[0].mxu0 %v968
  %v1241 = vpop.f32.mrb[0].mxu0
  %v1242 = vadd.f32 0.0, %v1241
  %v1243 = vpop.f32.mrb[0].mxu0
  %1244 = vmatprep.mubr.f32.mxu0 0.0
  %1245 = vmatmul.mubr.f32.gmra.mrb[0].mxu0 %v971
  %v1246 = vpop.f32.mrb[0].mxu0
  %v1247 = vadd.f32 0.0, %v1246
  %v1248 = vpop.f32.mrb[0].mxu0
  %1249 = vmatprep.mubr.f32.mxu0 0.0
  %1250 = vmatmul.mubr.f32.gmra.mrb[0].mxu0 %v974
  %v1251 = vpop.f32.mrb[0].mxu0
  %v1252 = vadd.f32 0.0, %v1251
  %v1253 = vpop.f32.mrb[0].mxu0
  %1254 = vmatprep.mubr.f32.mxu0 0.0
  %1255 = vmatmul.mubr.f32.gmra.mrb[0].mxu0 %v977
  %v1256 = vpop.f32.mrb[0].mxu0
  %v1257 = vadd.f32 0.0, %v1256
  %v1258 = vpop.f32.mrb[0].mxu0
  %1259 = vmatprep.mubr.f32.mxu0 0.0
  %1260 = vmatmul.mubr.f32.gmra.mrb[0].mxu0 %v980
  %v1261 = vpop.f32.mrb[0].mxu0
  %v1262 = vadd.f32 0.0, %v1261
  %v1263 = vpop.f32.mrb[0].mxu0
  %1264 = vmatprep.mubr.f32.mxu0 0.0
  %1265 = vmatmul.mubr.f32.gmra.mrb[0].mxu0 %v983
  %v1266 = vpop.f32.mrb[0].mxu0
  %v1267 = vadd.f32 0.0, %v1266
  %v1268 = vpop.f32.mrb[0].mxu0
  %1269 = vmatprep.mubr.f32.mxu0 0.0
  %1270 = vmatmul.mubr.f32.gmra.mrb[0].mxu0 %v986
  %v1271 = vpop.f32.mrb[0].mxu0
  %v1272 = vadd.f32 0.0, %v1271
  %v1273 = vpop.f32.mrb[0].mxu0
  %1274 = vmatprep.mubr.f32.mxu0 0.0
  %1275 = vmatmul.mubr.f32.gmra.mrb[0].mxu0 %v989
  %v1276 = vpop.f32.mrb[0].mxu0
  %v1277 = vadd.f32 0.0, %v1276
  %v1278 = vpop.f32.mrb[0].mxu0
  %1279 = vmatprep.mubr.f32.mxu0 0.0
  %1280 = vmatmul.mubr.f32.gmra.mrb[0].mxu0 %v992
  %v1281 = vpop.f32.mrb[0].mxu0
  %v1282 = vadd.f32 0.0, %v1281
  %v1283 = vpop.f32.mrb[0].mxu0
  %1284 = vmatprep.mubr.f32.mxu0 0.0
  %1285 = vmatmul.mubr.f32.gmra.mrb[0].mxu0 %v995
  %v1286 = vpop.f32.mrb[0].mxu0
  %v1287 = vadd.f32 0.0, %v1286
  %v1288 = vpop.f32.mrb[0].mxu0
  %1289 = vmatprep.mubr.f32.mxu0 0.0
  %1290 = vmatmul.mubr.f32.gmra.mrb[0].mxu0 %v998
  %v1291 = vpop.f32.mrb[0].mxu0
  %v1292 = vadd.f32 0.0, %v1291
  %v1293 = vpop.f32.mrb[0].mxu0
  %1294 = vmatprep.mubr.f32.mxu0 0.0
  %1295 = vmatmul.mubr.f32.gmra.mrb[0].mxu0 %v1001
  %v1296 = vpop.f32.mrb[0].mxu0
  %v1297 = vadd.f32 0.0, %v1296
  %v1298 = vpop.f32.mrb[0].mxu0
  %1299 = vmatprep.mubr.f32.mxu0 0.0
  %1300 = vmatmul.mubr.f32.gmra.mrb[0].mxu0 %v1004
  %v1301 = vpop.f32.mrb[0].mxu0
  %v1302 = vadd.f32 0.0, %v1301
  %v1303 = vpop.f32.mrb[0].mxu0
  %1304 = vmatprep.mubr.f32.mxu0 0.0
  %1305 = vmatmul.mubr.f32.gmra.mrb[0].mxu0 %v1007
  %v1306 = vpop.f32.mrb[0].mxu0
  %v1307 = vadd.f32 0.0, %v1306
  %v1308 = vpop.f32.mrb[0].mxu0
  %1309 = vmatprep.mubr.f32.mxu0 0.0
  %1310 = vmatmul.mubr.f32.gmra.mrb[0].mxu0 %v1010
  %v1311 = vpop.f32.mrb[0].mxu0
  %v1312 = vadd.f32 0.0, %v1311
  %v1313 = vpop.f32.mrb[0].mxu0
  %1314 = vmatprep.mubr.f32.mxu0 0.0
  %1315 = vmatmul.mubr.f32.gmra.mrb[0].mxu0 %v1013
  %v1316 = vpop.f32.mrb[0].mxu0
  %v1317 = vadd.f32 0.0, %v1316
  %v1318 = vpop.f32.mrb[0].mxu0
  %1319 = vmatprep.mubr.f32.mxu0 0.0
  %1320 = vmatmul.mubr.f32.gmra.mrb[0].mxu0 %v1016
  %v1321 = vpop.f32.mrb[0].mxu0
  %v1322 = vadd.f32 0.0, %v1321
  %v1323 = vpop.f32.mrb[0].mxu0
  %1324 = vmatprep.mubr.f32.mxu0 0.0
  %1325 = vmatmul.mubr.f32.gmra.mrb[0].mxu0 %v1019
  %v1326 = vpop.f32.mrb[0].mxu0
  %v1327 = vadd.f32 0.0, %v1326
  %v1328 = vpop.f32.mrb[0].mxu0
  %1329 = vmatprep.mubr.f32.mxu0 0.0
  %1330 = vmatmul.mubr.f32.gmra.mrb[0].mxu0 %v1022
  %v1331 = vpop.f32.mrb[0].mxu0
  %v1332 = vadd.f32 0.0, %v1331
  %v1333 = vpop.f32.mrb[0].mxu0
  %1334 = vmatprep.mubr.f32.mxu0 0.0
  %1335 = vmatmul.mubr.f32.gmra.mrb[0].mxu0 %v1025
  %v1336 = vpop.f32.mrb[0].mxu0
  %v1337 = vadd.f32 0.0, %v1336
  %v1338 = vpop.f32.mrb[0].mxu0
  %1339 = vmatprep.mubr.f32.mxu0 0.0
  %1340 = vmatmul.mubr.f32.gmra.mrb[0].mxu0 %v1028
  %v1341 = vpop.f32.mrb[0].mxu0
  %v1342 = vadd.f32 0.0, %v1341
  %v1343 = vpop.f32.mrb[0].mxu0
  %1344 = vmatprep.mubr.f32.mxu0 0.0
  %1345 = vmatmul.mubr.f32.gmra.mrb[0].mxu0 %v1031
  %v1346 = vpop.f32.mrb[0].mxu0
  %v1347 = vadd.f32 0.0, %v1346
  %v1348 = vpop.f32.mrb[0].mxu0
  %1349 = vmatprep.mubr.f32.mxu0 0.0
  %1350 = vmatmul.mubr.f32.gmra.mrb[0].mxu0 %v1034
  %v1351 = vpop.f32.mrb[0].mxu0
  %v1352 = vadd.f32 0.0, %v1351
  %v1353 = vpop.f32.mrb[0].mxu0
  %1354 = vmatprep.mubr.f32.mxu0 0.0
  %1355 = vmatmul.mubr.f32.gmra.mrb[0].mxu0 %v1037
  %v1356 = vpop.f32.mrb[0].mxu0
  %v1357 = vadd.f32 0.0, %v1356
  %v1358 = vpop.f32.mrb[0].mxu0
  %1359 = vmatprep.mubr.f32.mxu0 0.0
  %1360 = vmatmul.mubr.f32.gmra.mrb[0].mxu0 %v1040
  %v1361 = vpop.f32.mrb[0].mxu0
  %v1362 = vadd.f32 0.0, %v1361
  %v1363 = vpop.f32.mrb[0].mxu0
  %1364 = vmatprep.mubr.f32.mxu0 0.0
  %1365 = vmatmul.mubr.f32.gmra.mrb[0].mxu0 %v1043
  %v1366 = vpop.f32.mrb[0].mxu0
  %v1367 = vadd.f32 0.0, %v1366
  %v1368 = vpop.f32.mrb[0].mxu0
  %1369 = vmatprep.mubr.f32.mxu0 0.0
  %1370 = vmatmul.mubr.f32.gmra.mrb[0].mxu0 %v1046
  %v1371 = vpop.f32.mrb[0].mxu0
  %v1372 = vadd.f32 0.0, %v1371
  %v1373 = vpop.f32.mrb[0].mxu0
  %1374 = vmatprep.mubr.f32.mxu0 0.0
  %1375 = vmatmul.mubr.f32.gmra.mrb[0].mxu0 %v1049
  %v1376 = vpop.f32.mrb[0].mxu0
  %v1377 = vadd.f32 0.0, %v1376
  %v1378 = vpop.f32.mrb[0].mxu0
  %1379 = vmatprep.mubr.f32.mxu0 0.0
  %1380 = vmatmul.mubr.f32.gmra.mrb[0].mxu0 %v1052
  %v1381 = vpop.f32.mrb[0].mxu0
  %v1382 = vadd.f32 0.0, %v1381
  %v1383 = vpop.f32.mrb[0].mxu0
  %1384 = vmatprep.mubr.f32.mxu0 0.0
  %1385 = vmatmul.mubr.f32.gmra.mrb[0].mxu0 %v1055
  %v1386 = vpop.f32.mrb[0].mxu0
  %v1387 = vadd.f32 0.0, %v1386
  %v1388 = vpop.f32.mrb[0].mxu0
  %1389 = vmatprep.mubr.f32.mxu0 0.0
  %1390 = vmatmul.mubr.f32.gmra.mrb[0].mxu0 %v1058
  %v1391 = vpop.f32.mrb[0].mxu0
  %v1392 = vadd.f32 0.0, %v1391
  %v1393 = vpop.f32.mrb[0].mxu0
  %1394 = vmatprep.mubr.f32.mxu0 0.0
  %1395 = vmatmul.mubr.f32.gmra.mrb[0].mxu0 %v1061
  %v1396 = vpop.f32.mrb[0].mxu0
  %v1397 = vadd.f32 0.0, %v1396
  %v1398 = vpop.f32.mrb[0].mxu0
  %1399 = vmatprep.mubr.f32.mxu0 0.0
  %1400 = vmatmul.mubr.f32.gmra.mrb[0].mxu0 %v1064
  %v1401 = vpop.f32.mrb[0].mxu0
  %v1402 = vadd.f32 0.0, %v1401
  %v1403 = vpop.f32.mrb[0].mxu0
  %1404 = vmatprep.mubr.f32.mxu0 0.0
  %1405 = vmatmul.mubr.f32.gmra.mrb[0].mxu0 %v1067
  %v1406 = vpop.f32.mrb[0].mxu0
  %v1407 = vadd.f32 0.0, %v1406
  %v1408 = vpop.f32.mrb[0].mxu0
  %1409 = vmatprep.mubr.f32.mxu0 0.0
  %1410 = vmatmul.mubr.f32.gmra.mrb[0].mxu0 %v1070
  %v1411 = vpop.f32.mrb[0].mxu0
  %v1412 = vadd.f32 0.0, %v1411
  %v1413 = vpop.f32.mrb[0].mxu0
  %1414 = vmatprep.mubr.f32.mxu0 0.0
  %1415 = vmatmul.mubr.f32.gmra.mrb[0].mxu0 %v1073
  %v1416 = vpop.f32.mrb[0].mxu0
  %v1417 = vadd.f32 0.0, %v1416
  %v1418 = vpop.f32.mrb[0].mxu0
  %1419 = vmatprep.mubr.f32.mxu0 0.0
  %1420 = vmatmul.mubr.f32.gmra.mrb[0].mxu0 %v1076
  %v1421 = vpop.f32.mrb[0].mxu0
  %v1422 = vadd.f32 0.0, %v1421
  %v1423 = vpop.f32.mrb[0].mxu0
  %1424 = vmatprep.mubr.f32.mxu0 0.0
  %1425 = vmatmul.mubr.f32.gmra.mrb[0].mxu0 %v1079
  %v1426 = vpop.f32.mrb[0].mxu0
  %v1427 = vadd.f32 0.0, %v1426
  %v1428 = vpop.f32.mrb[0].mxu0
  %1429 = vmatprep.mubr.f32.mxu0 0.0
  %1430 = vmatmul.mubr.f32.gmra.mrb[0].mxu0 %v1082
  %v1431 = vpop.f32.mrb[0].mxu0
  %v1432 = vadd.f32 0.0, %v1431
  %v1433 = vpop.f32.mrb[0].mxu0
  %1434 = vmatprep.mubr.f32.mxu0 0.0
  %1435 = vmatmul.mubr.f32.gmra.mrb[0].mxu0 %v1085
  %v1436 = vpop.f32.mrb[0].mxu0
  %v1437 = vadd.f32 0.0, %v1436
  %v1438 = vpop.f32.mrb[0].mxu0
  %1439 = vmatprep.mubr.f32.mxu0 0.0
  %1440 = vmatmul.mubr.f32.gmra.mrb[0].mxu0 %v1088
  %v1441 = vpop.f32.mrb[0].mxu0
  %v1442 = vadd.f32 0.0, %v1441
  %v1443 = vpop.f32.mrb[0].mxu0
  %1444 = vmatprep.mubr.f32.mxu0 0.0
  %1445 = vmatmul.mubr.f32.gmra.mrb[0].mxu0 %v1091
  %v1446 = vpop.f32.mrb[0].mxu0
  %v1447 = vadd.f32 0.0, %v1446
  %v1448 = vpop.f32.mrb[0].mxu0
  %1449 = vmatprep.mubr.f32.mxu0 0.0
  %1450 = vmatmul.mubr.f32.gmra.mrb[0].mxu0 %v1094
  %v1451 = vpop.f32.mrb[0].mxu0
  %v1452 = vadd.f32 0.0, %v1451
  %v1453 = vpop.f32.mrb[0].mxu0
  %1454 = vmatprep.mubr.f32.mxu0 0.0
  %1455 = vmatmul.mubr.f32.gmra.mrb[0].mxu0 %v1097
  %v1456 = vpop.f32.mrb[0].mxu0
  %v1457 = vadd.f32 0.0, %v1456
  %v1458 = vpop.f32.mrb[0].mxu0
  %1459 = vmatprep.mubr.f32.mxu0 0.0
  %1460 = vmatmul.mubr.f32.gmra.mrb[0].mxu0 %v1100
  %v1461 = vpop.f32.mrb[0].mxu0
  %v1462 = vadd.f32 0.0, %v1461
  %v1463 = vpop.f32.mrb[0].mxu0
  %1464 = vmatprep.mubr.f32.mxu0 0.0
  %1465 = vmatmul.mubr.f32.gmra.mrb[0].mxu0 %v1103
  %v1466 = vpop.f32.mrb[0].mxu0
  %v1467 = vadd.f32 0.0, %v1466
  %v1468 = vpop.f32.mrb[0].mxu0
  %1469 = vmatprep.mubr.f32.mxu0 0.0
  %1470 = vmatmul.mubr.f32.gmra.mrb[0].mxu0 %v1106
  %v1471 = vpop.f32.mrb[0].mxu0
  %v1472 = vadd.f32 0.0, %v1471
  %v1473 = vpop.f32.mrb[0].mxu0
  %1474 = vmatprep.mubr.f32.mxu0 0.0
  %1475 = vmatmul.mubr.f32.gmra.mrb[0].mxu0 %v1109
  %v1476 = vpop.f32.mrb[0].mxu0
  %v1477 = vadd.f32 0.0, %v1476
  %v1478 = vpop.f32.mrb[0].mxu0
  %1479 = vmatprep.mubr.f32.mxu0 0.0
  %1480 = vmatmul.mubr.f32.gmra.mrb[0].mxu0 %v1112
  %v1481 = vpop.f32.mrb[0].mxu0
  %v1482 = vadd.f32 0.0, %v1481
  %v1483 = vpop.f32.mrb[0].mxu0
  %1484 = vmatprep.mubr.f32.mxu0 0.0
  %1485 = vmatmul.mubr.f32.gmra.mrb[0].mxu0 %v1115
  %v1486 = vpop.f32.mrb[0].mxu0
  %v1487 = vadd.f32 0.0, %v1486
  %v1488 = vpop.f32.mrb[0].mxu0
  %1489 = vmatprep.mubr.f32.mxu0 0.0
  %1490 = vmatmul.mubr.f32.gmra.mrb[0].mxu0 %v1118
  %v1491 = vpop.f32.mrb[0].mxu0
  %v1492 = vadd.f32 0.0, %v1491
  %v1493 = vpop.f32.mrb[0].mxu0
  %1494 = vmatprep.mubr.f32.mxu0 0.0
  %1495 = vmatmul.mubr.f32.gmra.mrb[0].mxu0 %v1121
  %v1496 = vpop.f32.mrb[0].mxu0
  %v1497 = vadd.f32 0.0, %v1496
  %v1498 = vpop.f32.mrb[0].mxu0
  %1499 = vmatprep.mubr.f32.mxu0 0.0
  %1500 = vmatmul.mubr.f32.gmra.mrb[0].mxu0 %v1124
  %v1501 = vpop.f32.mrb[0].mxu0
  %v1502 = vadd.f32 0.0, %v1501
  %v1503 = vpop.f32.mrb[0].mxu0
  %1504 = vmatprep.mubr.f32.mxu0 0.0
  %1505 = vmatmul.mubr.f32.gmra.mrb[0].mxu0 %v1127
  %v1506 = vpop.f32.mrb[0].mxu0
  %v1507 = vadd.f32 0.0, %v1506
  %v1508 = vpop.f32.mrb[0].mxu0
  %1509 = vmatprep.mubr.f32.mxu0 0.0
  %1510 = vmatmul.mubr.f32.gmra.mrb[0].mxu0 %v1130
  %v1511 = vpop.f32.mrb[0].mxu0
  %v1512 = vadd.f32 0.0, %v1511
  %v1513 = vpop.f32.mrb[0].mxu0
  %1514 = vmatprep.mubr.f32.mxu0 0.0
  %1515 = vmatmul.mubr.f32.gmra.mrb[0].mxu0 %v1133
  %v1516 = vpop.f32.mrb[0].mxu0
  %v1517 = vadd.f32 0.0, %v1516
  %v1518 = vpop.f32.mrb[0].mxu0
  %1519 = vdwg.mxu0
  %1528 = vrot.lane.b32.xlu0 %v1242, 127
  %v1529 = vpop.permute.xlu0 %1528
  %1530 = vrot.lane.b32.xlu0 %v1247, 127
  %v1531 = vpop.permute.xlu0 %1530
  %1532 = vrot.lane.b32.xlu0 %v1252, 127
  %v1533 = vpop.permute.xlu0 %1532
  %1534 = vrot.lane.b32.xlu0 %v1257, 127
  %v1535 = vpop.permute.xlu0 %1534
  %1536 = vrot.lane.b32.xlu0 %v1262, 127
  %v1537 = vpop.permute.xlu0 %1536
  %1538 = vrot.lane.b32.xlu0 %v1267, 127
  %v1539 = vpop.permute.xlu0 %1538
  %1540 = vrot.lane.b32.xlu0 %v1272, 127
  %v1541 = vpop.permute.xlu0 %1540
  %1542 = vrot.lane.b32.xlu0 %v1277, 127
  %v1543 = vpop.permute.xlu0 %1542
  %v1552 = vadd.f32 %v1202, %v1529
  %v1553 = vadd.f32 %v1207, %v1531
  %v1554 = vadd.f32 %v1212, %v1533
  %v1555 = vadd.f32 %v1217, %v1535
  %v1556 = vadd.f32 %v1222, %v1537
  %v1557 = vadd.f32 %v1227, %v1539
  %v1558 = vadd.f32 %v1232, %v1541
  %v1559 = vadd.f32 %v1237, %v1543
  %1568 = vrot.lane.b32.xlu0 %v1282, 126
  %v1569 = vpop.permute.xlu0 %1568
  %1570 = vrot.lane.b32.xlu0 %v1287, 126
  %v1571 = vpop.permute.xlu0 %1570
  %1572 = vrot.lane.b32.xlu0 %v1292, 126
  %v1573 = vpop.permute.xlu0 %1572
  %1574 = vrot.lane.b32.xlu0 %v1297, 126
  %v1575 = vpop.permute.xlu0 %1574
  %1576 = vrot.lane.b32.xlu0 %v1302, 126
  %v1577 = vpop.permute.xlu0 %1576
  %1578 = vrot.lane.b32.xlu0 %v1307, 126
  %v1579 = vpop.permute.xlu0 %1578
  %1580 = vrot.lane.b32.xlu0 %v1312, 126
  %v1581 = vpop.permute.xlu0 %1580
  %1582 = vrot.lane.b32.xlu0 %v1317, 126
  %v1583 = vpop.permute.xlu0 %1582
  %v1592 = vadd.f32 %v1552, %v1569
  %v1593 = vadd.f32 %v1553, %v1571
  %v1594 = vadd.f32 %v1554, %v1573
  %v1595 = vadd.f32 %v1555, %v1575
  %v1596 = vadd.f32 %v1556, %v1577
  %v1597 = vadd.f32 %v1557, %v1579
  %v1598 = vadd.f32 %v1558, %v1581
  %v1599 = vadd.f32 %v1559, %v1583
  %1608 = vrot.lane.b32.xlu0 %v1322, 125
  %v1609 = vpop.permute.xlu0 %1608
  %1610 = vrot.lane.b32.xlu0 %v1327, 125
  %v1611 = vpop.permute.xlu0 %1610
  %1612 = vrot.lane.b32.xlu0 %v1332, 125
  %v1613 = vpop.permute.xlu0 %1612
  %1614 = vrot.lane.b32.xlu0 %v1337, 125
  %v1615 = vpop.permute.xlu0 %1614
  %1616 = vrot.lane.b32.xlu0 %v1342, 125
  %v1617 = vpop.permute.xlu0 %1616
  %1618 = vrot.lane.b32.xlu0 %v1347, 125
  %v1619 = vpop.permute.xlu0 %1618
  %1620 = vrot.lane.b32.xlu0 %v1352, 125
  %v1621 = vpop.permute.xlu0 %1620
  %1622 = vrot.lane.b32.xlu0 %v1357, 125
  %v1623 = vpop.permute.xlu0 %1622
  %v1632 = vadd.f32 %v1592, %v1609
  %v1633 = vadd.f32 %v1593, %v1611
  %v1634 = vadd.f32 %v1594, %v1613
  %v1635 = vadd.f32 %v1595, %v1615
  %v1636 = vadd.f32 %v1596, %v1617
  %v1637 = vadd.f32 %v1597, %v1619
  %v1638 = vadd.f32 %v1598, %v1621
  %v1639 = vadd.f32 %v1599, %v1623
  %1648 = vrot.lane.b32.xlu0 %v1362, 124
  %v1649 = vpop.permute.xlu0 %1648
  %1650 = vrot.lane.b32.xlu0 %v1367, 124
  %v1651 = vpop.permute.xlu0 %1650
  %1652 = vrot.lane.b32.xlu0 %v1372, 124
  %v1653 = vpop.permute.xlu0 %1652
  %1654 = vrot.lane.b32.xlu0 %v1377, 124
  %v1655 = vpop.permute.xlu0 %1654
  %1656 = vrot.lane.b32.xlu0 %v1382, 124
  %v1657 = vpop.permute.xlu0 %1656
  %1658 = vrot.lane.b32.xlu0 %v1387, 124
  %v1659 = vpop.permute.xlu0 %1658
  %1660 = vrot.lane.b32.xlu0 %v1392, 124
  %v1661 = vpop.permute.xlu0 %1660
  %1662 = vrot.lane.b32.xlu0 %v1397, 124
  %v1663 = vpop.permute.xlu0 %1662
  %v1672 = vadd.f32 %v1632, %v1649
  %v1673 = vadd.f32 %v1633, %v1651
  %v1674 = vadd.f32 %v1634, %v1653
  %v1675 = vadd.f32 %v1635, %v1655
  %v1676 = vadd.f32 %v1636, %v1657
  %v1677 = vadd.f32 %v1637, %v1659
  %v1678 = vadd.f32 %v1638, %v1661
  %v1679 = vadd.f32 %v1639, %v1663
  %1688 = vrot.lane.b32.xlu0 %v1402, 123
  %v1689 = vpop.permute.xlu0 %1688
  %1690 = vrot.lane.b32.xlu0 %v1407, 123
  %v1691 = vpop.permute.xlu0 %1690
  %1692 = vrot.lane.b32.xlu0 %v1412, 123
  %v1693 = vpop.permute.xlu0 %1692
  %1694 = vrot.lane.b32.xlu0 %v1417, 123
  %v1695 = vpop.permute.xlu0 %1694
  %1696 = vrot.lane.b32.xlu0 %v1422, 123
  %v1697 = vpop.permute.xlu0 %1696
  %1698 = vrot.lane.b32.xlu0 %v1427, 123
  %v1699 = vpop.permute.xlu0 %1698
  %1700 = vrot.lane.b32.xlu0 %v1432, 123
  %v1701 = vpop.permute.xlu0 %1700
  %1702 = vrot.lane.b32.xlu0 %v1437, 123
  %v1703 = vpop.permute.xlu0 %1702
  %v1712 = vadd.f32 %v1672, %v1689
  %v1713 = vadd.f32 %v1673, %v1691
  %v1714 = vadd.f32 %v1674, %v1693
  %v1715 = vadd.f32 %v1675, %v1695
  %v1716 = vadd.f32 %v1676, %v1697
  %v1717 = vadd.f32 %v1677, %v1699
  %v1718 = vadd.f32 %v1678, %v1701
  %v1719 = vadd.f32 %v1679, %v1703
  %1728 = vrot.lane.b32.xlu0 %v1442, 122
  %v1729 = vpop.permute.xlu0 %1728
  %1730 = vrot.lane.b32.xlu0 %v1447, 122
  %v1731 = vpop.permute.xlu0 %1730
  %1732 = vrot.lane.b32.xlu0 %v1452, 122
  %v1733 = vpop.permute.xlu0 %1732
  %1734 = vrot.lane.b32.xlu0 %v1457, 122
  %v1735 = vpop.permute.xlu0 %1734
  %1736 = vrot.lane.b32.xlu0 %v1462, 122
  %v1737 = vpop.permute.xlu0 %1736
  %1738 = vrot.lane.b32.xlu0 %v1467, 122
  %v1739 = vpop.permute.xlu0 %1738
  %1740 = vrot.lane.b32.xlu0 %v1472, 122
  %v1741 = vpop.permute.xlu0 %1740
  %1742 = vrot.lane.b32.xlu0 %v1477, 122
  %v1743 = vpop.permute.xlu0 %1742
  %v1752 = vadd.f32 %v1712, %v1729
  %v1753 = vadd.f32 %v1713, %v1731
  %v1754 = vadd.f32 %v1714, %v1733
  %v1755 = vadd.f32 %v1715, %v1735
  %v1756 = vadd.f32 %v1716, %v1737
  %v1757 = vadd.f32 %v1717, %v1739
  %v1758 = vadd.f32 %v1718, %v1741
  %v1759 = vadd.f32 %v1719, %v1743
  %1768 = vrot.lane.b32.xlu0 %v1482, 121
  %v1769 = vpop.permute.xlu0 %1768
  %1770 = vrot.lane.b32.xlu0 %v1487, 121
  %v1771 = vpop.permute.xlu0 %1770
  %1772 = vrot.lane.b32.xlu0 %v1492, 121
  %v1773 = vpop.permute.xlu0 %1772
  %1774 = vrot.lane.b32.xlu0 %v1497, 121
  %v1775 = vpop.permute.xlu0 %1774
  %1776 = vrot.lane.b32.xlu0 %v1502, 121
  %v1777 = vpop.permute.xlu0 %1776
  %1778 = vrot.lane.b32.xlu0 %v1507, 121
  %v1779 = vpop.permute.xlu0 %1778
  %1780 = vrot.lane.b32.xlu0 %v1512, 121
  %v1781 = vpop.permute.xlu0 %1780
  %1782 = vrot.lane.b32.xlu0 %v1517, 121
  %v1783 = vpop.permute.xlu0 %1782
  %v1792 = vadd.f32 %v1752, %v1769
  %v1793 = vadd.f32 %v1753, %v1771
  %v1794 = vadd.f32 %v1754, %v1773
  %v1795 = vadd.f32 %v1755, %v1775
  %v1796 = vadd.f32 %v1756, %v1777
  %v1797 = vadd.f32 %v1757, %v1779
  %v1798 = vadd.f32 %v1758, %v1781
  %v1799 = vadd.f32 %v1759, %v1783
  %v1800 = vld [vmem:[%s5] sm:$0xff]
  %v1801 = vld [vmem:[%s5 + $0x8] sm:$0xff]
  %v1802 = vld [vmem:[%s5 + $0x10] sm:$0xff]
  %v1803 = vld [vmem:[%s5 + $0x18] sm:$0xff]
  %v1804 = vld [vmem:[%s5 + $0x20] sm:$0xff]
  %v1805 = vld [vmem:[%s5 + $0x28] sm:$0xff]
  %v1806 = vld [vmem:[%s5 + $0x30] sm:$0xff]
  %v1807 = vld [vmem:[%s5 + $0x38] sm:$0xff]
  %1809 = vset.pattern.permute.xlu0 0
  %1810 = vperm.xlu0 %1809, %v1800
  %v1811 = vpop.permute.xlu0 %1810
  %1814 = vset.pattern.permute.xlu0 0
  %1815 = vperm.xlu0 %1814, %v1801
  %v1816 = vpop.permute.xlu0 %1815
  %1819 = vset.pattern.permute.xlu0 0
  %1820 = vperm.xlu0 %1819, %v1802
  %v1821 = vpop.permute.xlu0 %1820
  %1824 = vset.pattern.permute.xlu0 0
  %1825 = vperm.xlu0 %1824, %v1803
  %v1826 = vpop.permute.xlu0 %1825
  %1829 = vset.pattern.permute.xlu0 0
  %1830 = vperm.xlu0 %1829, %v1804
  %v1831 = vpop.permute.xlu0 %1830
  %1834 = vset.pattern.permute.xlu0 0
  %1835 = vperm.xlu0 %1834, %v1805
  %v1836 = vpop.permute.xlu0 %1835
  %1839 = vset.pattern.permute.xlu0 0
  %1840 = vperm.xlu0 %1839, %v1806
  %v1841 = vpop.permute.xlu0 %1840
  %1844 = vset.pattern.permute.xlu0 0
  %1845 = vperm.xlu0 %1844, %v1807
  %v1846 = vpop.permute.xlu0 %1845
  %v1848 = vmul.f32 %v1792, %v1811
  %v1849 = vmul.f32 %v1793, %v1816
  %v1850 = vmul.f32 %v1794, %v1821
  %v1851 = vmul.f32 %v1795, %v1826
  %v1852 = vmul.f32 %v1796, %v1831
  %v1853 = vmul.f32 %v1797, %v1836
  %v1854 = vmul.f32 %v1798, %v1841
  %v1855 = vmul.f32 %v1799, %v1846
  %v1856 = vld [vmem:[%s6] sm:$0xff]
  %v1857 = vld [vmem:[%s6 + $0x8] sm:$0xff]
  %v1858 = vld [vmem:[%s6 + $0x10] sm:$0xff]
  %v1859 = vld [vmem:[%s6 + $0x18] sm:$0xff]
  %v1860 = vld [vmem:[%s6 + $0x20] sm:$0xff]
  %v1861 = vld [vmem:[%s6 + $0x28] sm:$0xff]
  %v1862 = vld [vmem:[%s6 + $0x30] sm:$0xff]
  %v1863 = vld [vmem:[%s6 + $0x38] sm:$0xff]
  %1865 = vset.pattern.permute.xlu0 0
  %1866 = vperm.xlu0 %1865, %v1856
  %v1867 = vpop.permute.xlu0 %1866
  %1870 = vset.pattern.permute.xlu0 0
  %1871 = vperm.xlu0 %1870, %v1857
  %v1872 = vpop.permute.xlu0 %1871
  %1875 = vset.pattern.permute.xlu0 0
  %1876 = vperm.xlu0 %1875, %v1858
  %v1877 = vpop.permute.xlu0 %1876
  %1880 = vset.pattern.permute.xlu0 0
  %1881 = vperm.xlu0 %1880, %v1859
  %v1882 = vpop.permute.xlu0 %1881
  %1885 = vset.pattern.permute.xlu0 0
  %1886 = vperm.xlu0 %1885, %v1860
  %v1887 = vpop.permute.xlu0 %1886
  %1890 = vset.pattern.permute.xlu0 0
  %1891 = vperm.xlu0 %1890, %v1861
  %v1892 = vpop.permute.xlu0 %1891
  %1895 = vset.pattern.permute.xlu0 0
  %1896 = vperm.xlu0 %1895, %v1862
  %v1897 = vpop.permute.xlu0 %1896
  %1900 = vset.pattern.permute.xlu0 0
  %1901 = vperm.xlu0 %1900, %v1863
  %v1902 = vpop.permute.xlu0 %1901
  %v1904 = vadd.f32 %v1848, %v1867
  %v1905 = vadd.f32 %v1849, %v1872
  %v1906 = vadd.f32 %v1850, %v1877
  %v1907 = vadd.f32 %v1851, %v1882
  %v1908 = vadd.f32 %v1852, %v1887
  %v1909 = vadd.f32 %v1853, %v1892
  %v1910 = vadd.f32 %v1854, %v1897
  %v1911 = vadd.f32 %v1855, %v1902
  %v1912 = vmax.f32 %v1904, 0.0
  %v1913 = vmax.f32 %v1905, 0.0
  %v1914 = vmax.f32 %v1906, 0.0
  %v1915 = vmax.f32 %v1907, 0.0
  %v1916 = vmax.f32 %v1908, 0.0
  %v1917 = vmax.f32 %v1909, 0.0
  %v1918 = vmax.f32 %v1910, 0.0
  %v1919 = vmax.f32 %v1911, 0.0
  %v1920 = vld [vmem:[%s8] sm:$0xff]
  %v1921 = vld [vmem:[%s8 + $0x8] sm:$0xff]
  %v1922 = vld [vmem:[%s8 + $0x10] sm:$0x1f]
  %vm1923 = vcmask 171008
  %v1925 = vsel %vm1923, %v1912, 0
  %v1928 = vsel %vm1923, %v1913, 0
  %v1931 = vsel %vm1923, %v1914, 0
  %v1934 = vsel %vm1923, %v1915, 0
  %v1937 = vsel %vm1923, %v1916, 0
  %v1940 = vsel %vm1923, %v1917, 0
  %v1943 = vsel %vm1923, %v1918, 0
  %v1946 = vsel %vm1923, %v1919, 0
  %vm1948 = vcmask 1044480
  %v1950 = vsel %vm1948, %v1922, 0
  %1952 = vmatprep.subr.mxu0 0.0
  %1953 = vmatpush1.msra.mxu0 %v1920
  %1954 = vmatprep.subr.mxu0 0.0
  %1955 = vmatpush1.msra.mxu0 %v1921
  %1956 = vmatprep.subr.mxu0 0.0
  %1957 = vmatpush1.msra.mxu0 %v1950
  %1958 = vmatprep.subr.mxu0 0.0
  %1959 = vmatpush1.msra.mxu0 0.0
  %1960 = vmatprep.subr.mxu0 0.0
  %1961 = vmatpush1.msra.mxu0 0.0
  %1962 = vmatprep.subr.mxu0 0.0
  %1963 = vmatpush1.msra.mxu0 0.0
  %1964 = vmatprep.subr.mxu0 0.0
  %1965 = vmatpush1.msra.mxu0 0.0
  %1966 = vmatprep.subr.mxu0 0.0
  %1967 = vmatpush1.msra.mxu0 0.0
  %1968 = vmatprep.subr.mxu0 0.0
  %1969 = vmatpush1.msra.mxu0 0.0
  %1970 = vmatprep.subr.mxu0 0.0
  %1971 = vmatpush1.msra.mxu0 0.0
  %1972 = vmatprep.subr.mxu0 0.0
  %1973 = vmatpush1.msra.mxu0 0.0
  %1974 = vmatprep.subr.mxu0 0.0
  %1975 = vmatpush1.msra.mxu0 0.0
  %1976 = vmatprep.subr.mxu0 0.0
  %1977 = vmatpush1.msra.mxu0 0.0
  %1978 = vmatprep.subr.mxu0 0.0
  %1979 = vmatpush1.msra.mxu0 0.0
  %1980 = vmatprep.subr.mxu0 0.0
  %1981 = vmatpush1.msra.mxu0 0.0
  %1982 = vmatprep.subr.mxu0 0.0
  %1983 = vmatpush1.msra.mxu0 0.0
  %1984 = vmatprep.subr.mxu0 0.0
  %1985 = vmatpush1.msra.mxu0 0.0
  %1986 = vmatprep.subr.mxu0 0.0
  %1987 = vmatpush1.msra.mxu0 0.0
  %1988 = vmatprep.subr.mxu0 0.0
  %1989 = vmatpush1.msra.mxu0 0.0
  %1990 = vmatprep.subr.mxu0 0.0
  %1991 = vmatpush1.msra.mxu0 0.0
  %1992 = vmatprep.subr.mxu0 0.0
  %1993 = vmatpush1.msra.mxu0 0.0
  %1994 = vmatprep.subr.mxu0 0.0
  %1995 = vmatpush1.msra.mxu0 0.0
  %1996 = vmatprep.subr.mxu0 0.0
  %1997 = vmatpush1.msra.mxu0 0.0
  %1998 = vmatprep.subr.mxu0 0.0
  %1999 = vmatpush1.msra.mxu0 0.0
  %2000 = vmatprep.subr.mxu0 0.0
  %2001 = vmatpush1.msra.mxu0 0.0
  %2002 = vmatprep.subr.mxu0 0.0
  %2003 = vmatpush1.msra.mxu0 0.0
  %2004 = vmatprep.subr.mxu0 0.0
  %2005 = vmatpush1.msra.mxu0 0.0
  %2006 = vmatprep.subr.mxu0 0.0
  %2007 = vmatpush1.msra.mxu0 0.0
  %2008 = vmatprep.subr.mxu0 0.0
  %2009 = vmatpush1.msra.mxu0 0.0
  %2010 = vmatprep.subr.mxu0 0.0
  %2011 = vmatpush1.msra.mxu0 0.0
  %2012 = vmatprep.subr.mxu0 0.0
  %2013 = vmatpush1.msra.mxu0 0.0
  %2014 = vmatprep.subr.mxu0 0.0
  %2015 = vmatpush1.msra.mxu0 0.0
  %2016 = vmatprep.mubr.f32.mxu0 0.0
  %2017 = vmatmul.mubr.f32.gmra.mrb[0].mxu0 %v1925
  %v2018 = vpop.f32.mrb[0].mxu0
  %v2019 = vadd.f32 0.0, %v2018
  %v2020 = vpop.f32.mrb[0].mxu0
  %2021 = vmatprep.mubr.f32.mxu0 0.0
  %2022 = vmatmul.mubr.f32.gmra.mrb[0].mxu0 %v1928
  %v2023 = vpop.f32.mrb[0].mxu0
  %v2024 = vadd.f32 0.0, %v2023
  %v2025 = vpop.f32.mrb[0].mxu0
  %2026 = vmatprep.mubr.f32.mxu0 0.0
  %2027 = vmatmul.mubr.f32.gmra.mrb[0].mxu0 %v1931
  %v2028 = vpop.f32.mrb[0].mxu0
  %v2029 = vadd.f32 0.0, %v2028
  %v2030 = vpop.f32.mrb[0].mxu0
  %2031 = vmatprep.mubr.f32.mxu0 0.0
  %2032 = vmatmul.mubr.f32.gmra.mrb[0].mxu0 %v1934
  %v2033 = vpop.f32.mrb[0].mxu0
  %v2034 = vadd.f32 0.0, %v2033
  %v2035 = vpop.f32.mrb[0].mxu0
  %2036 = vmatprep.mubr.f32.mxu0 0.0
  %2037 = vmatmul.mubr.f32.gmra.mrb[0].mxu0 %v1937
  %v2038 = vpop.f32.mrb[0].mxu0
  %v2039 = vadd.f32 0.0, %v2038
  %v2040 = vpop.f32.mrb[0].mxu0
  %2041 = vmatprep.mubr.f32.mxu0 0.0
  %2042 = vmatmul.mubr.f32.gmra.mrb[0].mxu0 %v1940
  %v2043 = vpop.f32.mrb[0].mxu0
  %v2044 = vadd.f32 0.0, %v2043
  %v2045 = vpop.f32.mrb[0].mxu0
  %2046 = vmatprep.mubr.f32.mxu0 0.0
  %2047 = vmatmul.mubr.f32.gmra.mrb[0].mxu0 %v1943
  %v2048 = vpop.f32.mrb[0].mxu0
  %v2049 = vadd.f32 0.0, %v2048
  %v2050 = vpop.f32.mrb[0].mxu0
  %2051 = vmatprep.mubr.f32.mxu0 0.0
  %2052 = vmatmul.mubr.f32.gmra.mrb[0].mxu0 %v1946
  %v2053 = vpop.f32.mrb[0].mxu0
  %v2054 = vadd.f32 0.0, %v2053
  %v2055 = vpop.f32.mrb[0].mxu0
  %2056 = vdwg.mxu0
  %v2057 = vld [vmem:[%s9] sm:$0xff]
  %v2058 = vld [vmem:[%s9 + $0x8] sm:$0x3]
  %v2059 = vld [vmem:[%s10] sm:$0xff]
  %v2060 = vld [vmem:[%s10 + $0x8] sm:$0x3]
  %2069 = vrot.lane.b32.xlu0 %v2019, 126
  %v2070 = vpop.permute.xlu0 %2069
  %2071 = vrot.lane.b32.xlu0 %v2024, 126
  %v2072 = vpop.permute.xlu0 %2071
  %2073 = vrot.lane.b32.xlu0 %v2029, 126
  %v2074 = vpop.permute.xlu0 %2073
  %2075 = vrot.lane.b32.xlu0 %v2034, 126
  %v2076 = vpop.permute.xlu0 %2075
  %2077 = vrot.lane.b32.xlu0 %v2039, 126
  %v2078 = vpop.permute.xlu0 %2077
  %2079 = vrot.lane.b32.xlu0 %v2044, 126
  %v2080 = vpop.permute.xlu0 %2079
  %2081 = vrot.lane.b32.xlu0 %v2049, 126
  %v2082 = vpop.permute.xlu0 %2081
  %2083 = vrot.lane.b32.xlu0 %v2054, 126
  %v2084 = vpop.permute.xlu0 %2083
  %vm2093 = vcmask 523264
  %v2095 = vsel %vm2093, %v2059, 0
  %v2098 = vsel %vm2093, %v2060, 0
  %2100 = vmatprep.subr.mxu0 0.0
  %2101 = vmatpush1.msra.mxu0 %v2070
  %2102 = vmatprep.subr.mxu0 0.0
  %2103 = vmatpush1.msra.mxu0 %v2072
  %2104 = vmatprep.subr.mxu0 0.0
  %2105 = vmatpush1.msra.mxu0 %v2074
  %2106 = vmatprep.subr.mxu0 0.0
  %2107 = vmatpush1.msra.mxu0 %v2076
  %2108 = vmatprep.subr.mxu0 0.0
  %2109 = vmatpush1.msra.mxu0 %v2078
  %2110 = vmatprep.subr.mxu0 0.0
  %2111 = vmatpush1.msra.mxu0 %v2080
  %2112 = vmatprep.subr.mxu0 0.0
  %2113 = vmatpush1.msra.mxu0 %v2082
  %2114 = vmatprep.subr.mxu0 0.0
  %2115 = vmatpush1.msra.mxu0 %v2084
  %2116 = vmatprep.subr.mxu0 0.0
  %2117 = vmatpush1.msra.mxu0 0.0
  %2118 = vmatprep.subr.mxu0 0.0
  %2119 = vmatpush1.msra.mxu0 0.0
  %2120 = vmatprep.subr.mxu0 0.0
  %2121 = vmatpush1.msra.mxu0 0.0
  %2122 = vmatprep.subr.mxu0 0.0
  %2123 = vmatpush1.msra.mxu0 0.0
  %2124 = vmatprep.subr.mxu0 0.0
  %2125 = vmatpush1.msra.mxu0 0.0
  %2126 = vmatprep.subr.mxu0 0.0
  %2127 = vmatpush1.msra.mxu0 0.0
  %2128 = vmatprep.subr.mxu0 0.0
  %2129 = vmatpush1.msra.mxu0 0.0
  %2130 = vmatprep.subr.mxu0 0.0
  %2131 = vmatpush1.msra.mxu0 0.0
  %2132 = vmatprep.subr.mxu0 0.0
  %2133 = vmatpush1.msra.mxu0 0.0
  %2134 = vmatprep.subr.mxu0 0.0
  %2135 = vmatpush1.msra.mxu0 0.0
  %2136 = vmatprep.subr.mxu0 0.0
  %2137 = vmatpush1.msra.mxu0 0.0
  %2138 = vmatprep.subr.mxu0 0.0
  %2139 = vmatpush1.msra.mxu0 0.0
  %2140 = vmatprep.subr.mxu0 0.0
  %2141 = vmatpush1.msra.mxu0 0.0
  %2142 = vmatprep.subr.mxu0 0.0
  %2143 = vmatpush1.msra.mxu0 0.0
  %2144 = vmatprep.subr.mxu0 0.0
  %2145 = vmatpush1.msra.mxu0 0.0
  %2146 = vmatprep.subr.mxu0 0.0
  %2147 = vmatpush1.msra.mxu0 0.0
  %2148 = vmatprep.subr.mxu0 0.0
  %2149 = vmatpush1.msra.mxu0 0.0
  %2150 = vmatprep.subr.mxu0 0.0
  %2151 = vmatpush1.msra.mxu0 0.0
  %2152 = vmatprep.subr.mxu0 0.0
  %2153 = vmatpush1.msra.mxu0 0.0
  %2154 = vmatprep.subr.mxu0 0.0
  %2155 = vmatpush1.msra.mxu0 0.0
  %2156 = vmatprep.subr.mxu0 0.0
  %2157 = vmatpush1.msra.mxu0 0.0
  %2158 = vmatprep.subr.mxu0 0.0
  %2159 = vmatpush1.msra.mxu0 0.0
  %2160 = vmatprep.subr.mxu0 0.0
  %2161 = vmatpush1.msra.mxu0 0.0
  %2162 = vmatprep.subr.mxu0 0.0
  %2163 = vmatpush1.msra.mxu0 0.0
  %2164 = vmatprep.mubr.f32.mxu0 0.0
  %2165 = vmatmul.mubr.f32.gmra.mrb[0].mxu0 %v2095
  %v2166 = vpop.f32.mrb[0].mxu0
  %v2167 = vadd.f32 0.0, %v2166
  %v2168 = vpop.f32.mrb[0].mxu0
  %2169 = vmatprep.mubr.f32.mxu0 0.0
  %2170 = vmatmul.mubr.f32.gmra.mrb[0].mxu0 %v2098
  %v2171 = vpop.f32.mrb[0].mxu0
  %v2172 = vadd.f32 0.0, %v2171
  %v2173 = vpop.f32.mrb[0].mxu0
  %2174 = vdwg.mxu0
  %v2176 = vsel %vm2093, %v2057, 0
  %v2179 = vsel %vm2093, %v2058, 0
  %2181 = vmatprep.subr.mxu0 0.0
  %2182 = vmatpush1.msra.mxu0 %v2019
  %2183 = vmatprep.subr.mxu0 0.0
  %2184 = vmatpush1.msra.mxu0 %v2024
  %2185 = vmatprep.subr.mxu0 0.0
  %2186 = vmatpush1.msra.mxu0 %v2029
  %2187 = vmatprep.subr.mxu0 0.0
  %2188 = vmatpush1.msra.mxu0 %v2034
  %2189 = vmatprep.subr.mxu0 0.0
  %2190 = vmatpush1.msra.mxu0 %v2039
  %2191 = vmatprep.subr.mxu0 0.0
  %2192 = vmatpush1.msra.mxu0 %v2044
  %2193 = vmatprep.subr.mxu0 0.0
  %2194 = vmatpush1.msra.mxu0 %v2049
  %2195 = vmatprep.subr.mxu0 0.0
  %2196 = vmatpush1.msra.mxu0 %v2054
  %2197 = vmatprep.subr.mxu0 0.0
  %2198 = vmatpush1.msra.mxu0 0.0
  %2199 = vmatprep.subr.mxu0 0.0
  %2200 = vmatpush1.msra.mxu0 0.0
  %2201 = vmatprep.subr.mxu0 0.0
  %2202 = vmatpush1.msra.mxu0 0.0
  %2203 = vmatprep.subr.mxu0 0.0
  %2204 = vmatpush1.msra.mxu0 0.0
  %2205 = vmatprep.subr.mxu0 0.0
  %2206 = vmatpush1.msra.mxu0 0.0
  %2207 = vmatprep.subr.mxu0 0.0
  %2208 = vmatpush1.msra.mxu0 0.0
  %2209 = vmatprep.subr.mxu0 0.0
  %2210 = vmatpush1.msra.mxu0 0.0
  %2211 = vmatprep.subr.mxu0 0.0
  %2212 = vmatpush1.msra.mxu0 0.0
  %2213 = vmatprep.subr.mxu0 0.0
  %2214 = vmatpush1.msra.mxu0 0.0
  %2215 = vmatprep.subr.mxu0 0.0
  %2216 = vmatpush1.msra.mxu0 0.0
  %2217 = vmatprep.subr.mxu0 0.0
  %2218 = vmatpush1.msra.mxu0 0.0
  %2219 = vmatprep.subr.mxu0 0.0
  %2220 = vmatpush1.msra.mxu0 0.0
  %2221 = vmatprep.subr.mxu0 0.0
  %2222 = vmatpush1.msra.mxu0 0.0
  %2223 = vmatprep.subr.mxu0 0.0
  %2224 = vmatpush1.msra.mxu0 0.0
  %2225 = vmatprep.subr.mxu0 0.0
  %2226 = vmatpush1.msra.mxu0 0.0
  %2227 = vmatprep.subr.mxu0 0.0
  %2228 = vmatpush1.msra.mxu0 0.0
  %2229 = vmatprep.subr.mxu0 0.0
  %2230 = vmatpush1.msra.mxu0 0.0
  %2231 = vmatprep.subr.mxu0 0.0
  %2232 = vmatpush1.msra.mxu0 0.0
  %2233 = vmatprep.subr.mxu0 0.0
  %2234 = vmatpush1.msra.mxu0 0.0
  %2235 = vmatprep.subr.mxu0 0.0
  %2236 = vmatpush1.msra.mxu0 0.0
  %2237 = vmatprep.subr.mxu0 0.0
  %2238 = vmatpush1.msra.mxu0 0.0
  %2239 = vmatprep.subr.mxu0 0.0
  %2240 = vmatpush1.msra.mxu0 0.0
  %2241 = vmatprep.subr.mxu0 0.0
  %2242 = vmatpush1.msra.mxu0 0.0
  %2243 = vmatprep.subr.mxu0 0.0
  %2244 = vmatpush1.msra.mxu0 0.0
  %2245 = vmatprep.mubr.f32.mxu0 0.0
  %2246 = vmatmul.mubr.f32.gmra.mrb[0].mxu0 %v2176
  %v2247 = vpop.f32.mrb[0].mxu0
  %v2248 = vadd.f32 %v2167, %v2247
  %v2249 = vpop.f32.mrb[0].mxu0
  %2250 = vmatprep.mubr.f32.mxu0 0.0
  %2251 = vmatmul.mubr.f32.gmra.mrb[0].mxu0 %v2179
  %v2252 = vpop.f32.mrb[0].mxu0
  %v2253 = vadd.f32 %v2172, %v2252
  %v2254 = vpop.f32.mrb[0].mxu0
  %2255 = vdwg.mxu0
  %v2256 = vld [vmem:[%s11] sm:$0xff]
  %v2257 = vld [vmem:[%s11 + $0x8] sm:$0x3]
  %2259 = vset.pattern.permute.xlu0 0
  %2260 = vperm.xlu0 %2259, %v2256
  %v2261 = vpop.permute.xlu0 %2260
  %2264 = vset.pattern.permute.xlu0 0
  %2265 = vperm.xlu0 %2264, %v2257
  %v2266 = vpop.permute.xlu0 %2265
  %v2268 = vadd.f32 %v2248, %v2261
  %v2269 = vadd.f32 %v2253, %v2266
  %vm2270 = vcmask 15360
  %v2271 = vsel %vm2270, %v2268, -inf
  %vm2272 = vcmask 9216
  %v2273 = vsel %vm2272, %v2269, -inf
  %v2274 = vmax.f32 %v2271, %v2273
  %v2275 = vrot.slane %v2274, 4
  %v2276 = vmax.f32 %v2274, %v2275
  %v2277 = vrot.slane %v2276, 2
  %v2278 = vmax.f32 %v2276, %v2277
  %v2279 = vrot.slane %v2278, 1
  %v2280 = vmax.f32 %v2278, %v2279
  %v2281 = vsub.f32 %v2268, %v2280
  %v2282 = vsub.f32 %v2269, %v2280
  %v2283 = vmul.f32 %v2281, 1.442695
  %v2284 = vpow.pop %v2283
  %v2285 = vmul.f32 %v2282, 1.442695
  %v2286 = vpow.pop %v2285
  %v2287 = vsel %vm2270, %v2284, 0.0
  %v2288 = vsel %vm2272, %v2286, 0.0
  %v2289 = vadd.f32 %v2287, %v2288
  %v2290 = vrot.slane %v2289, 4
  %v2291 = vadd.f32 %v2289, %v2290
  %v2292 = vrot.slane %v2291, 2
  %v2293 = vadd.f32 %v2291, %v2292
  %v2294 = vrot.slane %v2293, 1
  %v2295 = vadd.f32 %v2293, %v2294
  %v2296 = vlog2.pop %v2295
  %v2297 = vmul.f32 %v2296, 0.6931472
  %v2298 = vsub.f32 %v2281, %v2297
  %v2299 = vsub.f32 %v2282, %v2297
  %2300 = vst.msk [vmem:[%s12] sm:$0xff] %vm2270, %v2298
  %2301 = vst.msk [vmem:[%s12 + $0x8] sm:$0x3] %vm2272, %v2299
  // Predicated region
  $region50: #{forward.1} parent=0 // pred_check
    _
  $region51: #{forward.1} parent=0 // pred_check_branch
    %2303 = sbr.rel (0) target = $region53
  $region52: #{forward.1} parent=0 // pred_region
    _
  $region53: #{forward.1} parent=0 // pred_fallthru
    _
  // Predicated region
  $region54: #{forward.1} parent=0 // pred_check
    _
  $region55: #{forward.1} parent=0 // pred_check_branch
    %2305 = sbr.rel (0) target = $region57
  $region56: #{forward.1} parent=0 // pred_region
    _
  $region57: #{forward.1} parent=0 // pred_fallthru
    _

</llo_original>
